<compile_context>
chip_gen: v7x
topology: tpu7x:2x2x1
jax: 0.10.0
libtpu: 0.0.40
codegen_flags: <defaults>
</compile_context>

<pallas_src>
import functools

import jax
import jax.numpy as jnp
from jax.experimental import pallas as pl
from jax.experimental.pallas import tpu as pltpu


def _round_up(x, m):
    return (x + m - 1) // m * m


def _conv_bn_act_kernel(x_ref, w_ref, shift_ref, o_ref, *, kh, kw, stride, tr, wo, act):
    # x_ref:     (tr_in, wp, cin_g)     bf16  -- padded NHWC input rows for this tile (with halo)
    # w_ref:     (kh*kw, cin_g, coutp)  bf16  -- per-tap weights with BN scale folded in
    # shift_ref: (1, coutp)             f32   -- folded BN shift
    # o_ref:     (tr*wo, coutp)               -- lane-dense output tile
    cin_g = x_ref.shape[-1]
    coutp = o_ref.shape[-1]
    x = x_ref[...]
    acc = jnp.zeros((tr * wo, coutp), jnp.float32)
    for i in range(kh):              # static unroll over conv taps: Kh*Kw shifted matmuls
        for j in range(kw):
            win = jax.lax.slice(
                x,
                (i, j, 0),
                (i + (tr - 1) * stride + 1, j + (wo - 1) * stride + 1, cin_g),
                (stride, stride, 1))                       # (tr, wo, cin_g)
            xm = win.reshape(tr * wo, cin_g)
            acc = acc + jnp.dot(xm, w_ref[i * kw + j],
                                preferred_element_type=jnp.float32)
    y = acc + shift_ref[...]
    if act == "relu":
        y = jnp.maximum(y, 0.0)
    elif act == "hard_swish":
        # x * relu6(x + 3) / 6  (matches torch.nn.Hardswish)
        y = y * jnp.clip(y + 3.0, 0.0, 6.0) * (1.0 / 6.0)
    o_ref[...] = y.astype(o_ref.dtype)


def conv_bn_layer(x, weight, gamma, beta, running_mean, running_var,
                  *, stride, padding, groups=1, act=None, eps=1e-5):
    """Forward pass of ConvBNLayer. x: (N, Cin, H, W) NCHW. Returns NCHW."""
    n, cin, h, w = x.shape
    cout, cin_g, kh, kw = weight.shape
    assert cin_g == cin // groups
    G = groups
    cout_g = cout // G

    ho = (h + 2 * padding - kh) // stride + 1
    wo = (w + 2 * padding - kw) // stride + 1
    wp = w + 2 * padding

    # Lane-dense output channels per group.
    coutp = _round_up(cout_g, 128)

    # Row tile: target ~1024 output rows (M) per grid step, bounded by a VMEM budget.
    def _tile_bytes(tr_):
        tr_in_ = (tr_ - 1) * stride + kh
        return (tr_in_ * wp * cin_g * 2          # bf16 input window
                + tr_ * wo * coutp * 4           # f32 accumulator
                + tr_ * wo * coutp * 4)          # f32 output tile
    tr = max(1, min(ho, max(1, 1024 // max(1, wo))))
    while tr > 1 and _tile_bytes(tr) > 6 * 1024 * 1024:
        tr = (tr + 1) // 2
    n_tiles = pl.cdiv(ho, tr)
    ho_pad = n_tiles * tr
    tr_in = (tr - 1) * stride + kh
    T = n * n_tiles

    # ---- Fold BN (eval mode): scale into weight columns, shift kept for the kernel epilogue.
    scale = gamma / jnp.sqrt(running_var + eps)             # (cout,)
    shift = beta - running_mean * scale                     # (cout,)

    wg = weight.reshape(G, cout_g, cin_g, kh, kw).transpose(0, 3, 4, 2, 1)  # (G,kh,kw,cin_g,cout_g)
    wg = wg * scale.reshape(G, 1, 1, 1, cout_g)
    wg = jnp.pad(wg, ((0, 0), (0, 0), (0, 0), (0, 0), (0, coutp - cout_g)))
    wmat = wg.reshape(G, kh * kw, cin_g, coutp).astype(jnp.bfloat16)

    shift_g = jnp.pad(shift.reshape(G, 1, cout_g),
                      ((0, 0), (0, 0), (0, coutp - cout_g))).astype(jnp.float32)

    # ---- NHWC, group-split, spatially padded input; per-row-tile windows with halo rows.
    hp = max(h + 2 * padding, (ho_pad - 1) * stride + kh)
    x_nhwc = x.transpose(0, 2, 3, 1).reshape(n, h, w, G, cin_g).astype(jnp.bfloat16)
    xp = jnp.pad(x_nhwc, ((0, 0), (padding, hp - h - padding),
                          (padding, padding), (0, 0), (0, 0)))
    row_idx = (jnp.arange(n_tiles) * (tr * stride))[:, None] + jnp.arange(tr_in)[None, :]
    xg = xp[:, row_idx]                                       # (n, n_tiles, tr_in, wp, G, cin_g)
    x_halo = xg.transpose(4, 0, 1, 2, 3, 5).reshape(G, T, tr_in, wp, cin_g)

    kernel = functools.partial(_conv_bn_act_kernel, kh=kh, kw=kw, stride=stride,
                               tr=tr, wo=wo, act=act)

    vmem_limit = int(min(48 * 1024 * 1024,
                         max(16 * 1024 * 1024,
                             4 * _tile_bytes(tr) + 2 * kh * kw * cin_g * coutp * 2)))

    out = pl.pallas_call(
        kernel,
        out_shape=jax.ShapeDtypeStruct((T, tr * wo, G * coutp), x.dtype),
        grid_spec=pltpu.PrefetchScalarGridSpec(
            num_scalar_prefetch=0,
            grid=(G, T),
            in_specs=[
                # input row window for (group g, tile t)
                pl.BlockSpec((None, None, tr_in, wp, cin_g), lambda g, t: (g, t, 0, 0, 0)),
                # per-group weights (resident across all tiles of a group)
                pl.BlockSpec((None, kh * kw, cin_g, coutp), lambda g, t: (g, 0, 0, 0)),
                # per-group BN shift
                pl.BlockSpec((None, 1, coutp), lambda g, t: (g, 0, 0)),
            ],
            out_specs=pl.BlockSpec((None, tr * wo, coutp), lambda g, t: (t, 0, g)),
        ),
        compiler_params=pltpu.CompilerParams(
            dimension_semantics=("parallel", "parallel"),
            vmem_limit_bytes=vmem_limit),
    )(x_halo, wmat, shift_g)

    # (T, tr*wo, G*coutp) -> drop channel/row padding once -> (N, Cout, Ho, Wo)
    y = out.reshape(n, n_tiles, tr, wo, G, coutp)[..., :cout_g]
    y = y.reshape(n, ho_pad, wo, cout)[:, :ho]
    return y.transpose(0, 3, 1, 2)


def _reference(x, weight, gamma, beta, rm, rv, *, stride, padding, groups, act, eps=1e-5):
    y = jax.lax.conv_general_dilated(
        x, weight, (stride, stride), [(padding, padding), (padding, padding)],
        feature_group_count=groups,
        dimension_numbers=("NCHW", "OIHW", "NCHW"))
    scale = gamma / jnp.sqrt(rv + eps)
    shift = beta - rm * scale
    y = y * scale[None, :, None, None] + shift[None, :, None, None]
    if act == "relu":
        y = jnp.maximum(y, 0.0)
    elif act == "hard_swish":
        y = y * jnp.clip(y + 3.0, 0.0, 6.0) / 6.0
    return y


if __name__ == "__main__":
    # Module config: ConvBNLayer(in_channels=4, out_channels=8, kernel_size=3,
    #                            stride=1, padding=1, groups=1, act='hard_swish')
    N, CIN, COUT, H, W = 2, 4, 8, 16, 16
    KH = KW = 3
    STRIDE, PADDING, GROUPS, ACT = 1, 1, 1, "hard_swish"

    key = jax.random.PRNGKey(0)
    k_x, k_w, k_g, k_b, k_m, k_v = jax.random.split(key, 6)

    x = jax.random.normal(k_x, (N, CIN, H, W), dtype=jnp.float32)
    weight = 0.1 * jax.random.normal(k_w, (COUT, CIN // GROUPS, KH, KW), dtype=jnp.float32)
    gamma = 0.5 + jax.random.uniform(k_g, (COUT,), dtype=jnp.float32)
    beta = 0.1 * jax.random.normal(k_b, (COUT,), dtype=jnp.float32)
    running_mean = 0.1 * jax.random.normal(k_m, (COUT,), dtype=jnp.float32)
    running_var = 0.5 + jax.random.uniform(k_v, (COUT,), dtype=jnp.float32)

    y = conv_bn_layer(x, weight, gamma, beta, running_mean, running_var,
                      stride=STRIDE, padding=PADDING, groups=GROUPS, act=ACT)
    y = jax.block_until_ready(y)

    y_ref = _reference(x, weight, gamma, beta, running_mean, running_var,
                       stride=STRIDE, padding=PADDING, groups=GROUPS, act=ACT)
    assert y.shape == (N, COUT, H, W)
    # bf16 MXU operands -> looser tolerance than the f32 reference.
    assert jnp.allclose(y, y_ref, atol=5e-2, rtol=5e-2), "mismatch vs JAX reference"

    print("KERNEL_OK")
</pallas_src>

<mosaic_0001>
module attributes {stable_mosaic.version = 11 : i64} {
  func.func @_conv_bn_act_kernel(%arg0: i32, %arg1: i32, %arg2: memref<1x1x18x18x4xbf16, #tpu.memory_space<vmem>>, %arg3: memref<1x9x4x128xbf16, #tpu.memory_space<vmem>>, %arg4: memref<1x1x128xf32, #tpu.memory_space<vmem>>, %arg5: memref<1x256x128xf32, #tpu.memory_space<vmem>>) attributes {dimension_semantics = [#tpu.dimension_semantics<parallel>, #tpu.dimension_semantics<parallel>], iteration_bounds = array<i64: 1, 2>, scalar_prefetch = 0 : i64, scratch_operands = 0 : i64, tpu.core_type = #tpu.core_type<tc>, window_params = [{transform_indices = @transform_0, window_bounds = array<i64: 1, 1, 18, 18, 4>}, {transform_indices = @transform_1, window_bounds = array<i64: 1, 9, 4, 128>}, {transform_indices = @transform_2, window_bounds = array<i64: 1, 1, 128>}, {transform_indices = @transform_3, window_bounds = array<i64: 1, 256, 128>}]} {
    %c0 = arith.constant 0 : index
    %c0_0 = arith.constant 0 : index
    %c0_1 = arith.constant 0 : index
    %c0_2 = arith.constant 0 : index
    %c0_3 = arith.constant 0 : index
    %0 = vector.load %arg2[%c0, %c0_0, %c0_1, %c0_2, %c0_3] : memref<1x1x18x18x4xbf16, #tpu.memory_space<vmem>>, vector<1x1x18x18x4xbf16>
    %1 = vector.shape_cast %0 : vector<1x1x18x18x4xbf16> to vector<18x18x4xbf16>
    %cst = arith.constant 0.000000e+00 : f32
    %2 = vector.broadcast %cst : f32 to vector<256x128xf32>
    %3 = vector.extract_strided_slice %1 {offsets = [0, 0, 0], sizes = [16, 16, 4], strides = [1, 1, 1]} : vector<18x18x4xbf16> to vector<16x16x4xbf16>
    %4 = vector.shape_cast %3 : vector<16x16x4xbf16> to vector<256x4xbf16>
    %c0_4 = arith.constant 0 : index
    %c0_5 = arith.constant 0 : index
    %c0_6 = arith.constant 0 : index
    %c0_7 = arith.constant 0 : index
    %5 = vector.load %arg3[%c0_4, %c0_5, %c0_6, %c0_7] : memref<1x9x4x128xbf16, #tpu.memory_space<vmem>>, vector<1x1x4x128xbf16>
    %6 = vector.shape_cast %5 : vector<1x1x4x128xbf16> to vector<4x128xbf16>
    %cst_8 = arith.constant dense<0.000000e+00> : vector<256x128xf32>
    %7 = tpu.matmul %4, %6, %cst_8 {dimension_numbers = #tpu.dot_dimension_numbers<[1], [0], [0], [1], [0, 0, 1, 1], [], []>} : vector<256x4xbf16>, vector<4x128xbf16>, vector<256x128xf32> -> vector<256x128xf32>
    %8 = arith.addf %2, %7 : vector<256x128xf32>
    %9 = vector.extract_strided_slice %1 {offsets = [0, 1, 0], sizes = [16, 16, 4], strides = [1, 1, 1]} : vector<18x18x4xbf16> to vector<16x16x4xbf16>
    %10 = vector.shape_cast %9 : vector<16x16x4xbf16> to vector<256x4xbf16>
    %c0_9 = arith.constant 0 : index
    %c1 = arith.constant 1 : index
    %c0_10 = arith.constant 0 : index
    %c0_11 = arith.constant 0 : index
    %11 = vector.load %arg3[%c0_9, %c1, %c0_10, %c0_11] : memref<1x9x4x128xbf16, #tpu.memory_space<vmem>>, vector<1x1x4x128xbf16>
    %12 = vector.shape_cast %11 : vector<1x1x4x128xbf16> to vector<4x128xbf16>
    %cst_12 = arith.constant dense<0.000000e+00> : vector<256x128xf32>
    %13 = tpu.matmul %10, %12, %cst_12 {dimension_numbers = #tpu.dot_dimension_numbers<[1], [0], [0], [1], [0, 0, 1, 1], [], []>} : vector<256x4xbf16>, vector<4x128xbf16>, vector<256x128xf32> -> vector<256x128xf32>
    %14 = arith.addf %8, %13 : vector<256x128xf32>
    %15 = vector.extract_strided_slice %1 {offsets = [0, 2, 0], sizes = [16, 16, 4], strides = [1, 1, 1]} : vector<18x18x4xbf16> to vector<16x16x4xbf16>
    %16 = vector.shape_cast %15 : vector<16x16x4xbf16> to vector<256x4xbf16>
    %c0_13 = arith.constant 0 : index
    %c2 = arith.constant 2 : index
    %c0_14 = arith.constant 0 : index
    %c0_15 = arith.constant 0 : index
    %17 = vector.load %arg3[%c0_13, %c2, %c0_14, %c0_15] : memref<1x9x4x128xbf16, #tpu.memory_space<vmem>>, vector<1x1x4x128xbf16>
    %18 = vector.shape_cast %17 : vector<1x1x4x128xbf16> to vector<4x128xbf16>
    %cst_16 = arith.constant dense<0.000000e+00> : vector<256x128xf32>
    %19 = tpu.matmul %16, %18, %cst_16 {dimension_numbers = #tpu.dot_dimension_numbers<[1], [0], [0], [1], [0, 0, 1, 1], [], []>} : vector<256x4xbf16>, vector<4x128xbf16>, vector<256x128xf32> -> vector<256x128xf32>
    %20 = arith.addf %14, %19 : vector<256x128xf32>
    %21 = vector.extract_strided_slice %1 {offsets = [1, 0, 0], sizes = [16, 16, 4], strides = [1, 1, 1]} : vector<18x18x4xbf16> to vector<16x16x4xbf16>
    %22 = vector.shape_cast %21 : vector<16x16x4xbf16> to vector<256x4xbf16>
    %c0_17 = arith.constant 0 : index
    %c3 = arith.constant 3 : index
    %c0_18 = arith.constant 0 : index
    %c0_19 = arith.constant 0 : index
    %23 = vector.load %arg3[%c0_17, %c3, %c0_18, %c0_19] : memref<1x9x4x128xbf16, #tpu.memory_space<vmem>>, vector<1x1x4x128xbf16>
    %24 = vector.shape_cast %23 : vector<1x1x4x128xbf16> to vector<4x128xbf16>
    %cst_20 = arith.constant dense<0.000000e+00> : vector<256x128xf32>
    %25 = tpu.matmul %22, %24, %cst_20 {dimension_numbers = #tpu.dot_dimension_numbers<[1], [0], [0], [1], [0, 0, 1, 1], [], []>} : vector<256x4xbf16>, vector<4x128xbf16>, vector<256x128xf32> -> vector<256x128xf32>
    %26 = arith.addf %20, %25 : vector<256x128xf32>
    %27 = vector.extract_strided_slice %1 {offsets = [1, 1, 0], sizes = [16, 16, 4], strides = [1, 1, 1]} : vector<18x18x4xbf16> to vector<16x16x4xbf16>
    %28 = vector.shape_cast %27 : vector<16x16x4xbf16> to vector<256x4xbf16>
    %c0_21 = arith.constant 0 : index
    %c4 = arith.constant 4 : index
    %c0_22 = arith.constant 0 : index
    %c0_23 = arith.constant 0 : index
    %29 = vector.load %arg3[%c0_21, %c4, %c0_22, %c0_23] : memref<1x9x4x128xbf16, #tpu.memory_space<vmem>>, vector<1x1x4x128xbf16>
    %30 = vector.shape_cast %29 : vector<1x1x4x128xbf16> to vector<4x128xbf16>
    %cst_24 = arith.constant dense<0.000000e+00> : vector<256x128xf32>
    %31 = tpu.matmul %28, %30, %cst_24 {dimension_numbers = #tpu.dot_dimension_numbers<[1], [0], [0], [1], [0, 0, 1, 1], [], []>} : vector<256x4xbf16>, vector<4x128xbf16>, vector<256x128xf32> -> vector<256x128xf32>
    %32 = arith.addf %26, %31 : vector<256x128xf32>
    %33 = vector.extract_strided_slice %1 {offsets = [1, 2, 0], sizes = [16, 16, 4], strides = [1, 1, 1]} : vector<18x18x4xbf16> to vector<16x16x4xbf16>
    %34 = vector.shape_cast %33 : vector<16x16x4xbf16> to vector<256x4xbf16>
    %c0_25 = arith.constant 0 : index
    %c5 = arith.constant 5 : index
    %c0_26 = arith.constant 0 : index
    %c0_27 = arith.constant 0 : index
    %35 = vector.load %arg3[%c0_25, %c5, %c0_26, %c0_27] : memref<1x9x4x128xbf16, #tpu.memory_space<vmem>>, vector<1x1x4x128xbf16>
    %36 = vector.shape_cast %35 : vector<1x1x4x128xbf16> to vector<4x128xbf16>
    %cst_28 = arith.constant dense<0.000000e+00> : vector<256x128xf32>
    %37 = tpu.matmul %34, %36, %cst_28 {dimension_numbers = #tpu.dot_dimension_numbers<[1], [0], [0], [1], [0, 0, 1, 1], [], []>} : vector<256x4xbf16>, vector<4x128xbf16>, vector<256x128xf32> -> vector<256x128xf32>
    %38 = arith.addf %32, %37 : vector<256x128xf32>
    %39 = vector.extract_strided_slice %1 {offsets = [2, 0, 0], sizes = [16, 16, 4], strides = [1, 1, 1]} : vector<18x18x4xbf16> to vector<16x16x4xbf16>
    %40 = vector.shape_cast %39 : vector<16x16x4xbf16> to vector<256x4xbf16>
    %c0_29 = arith.constant 0 : index
    %c6 = arith.constant 6 : index
    %c0_30 = arith.constant 0 : index
    %c0_31 = arith.constant 0 : index
    %41 = vector.load %arg3[%c0_29, %c6, %c0_30, %c0_31] : memref<1x9x4x128xbf16, #tpu.memory_space<vmem>>, vector<1x1x4x128xbf16>
    %42 = vector.shape_cast %41 : vector<1x1x4x128xbf16> to vector<4x128xbf16>
    %cst_32 = arith.constant dense<0.000000e+00> : vector<256x128xf32>
    %43 = tpu.matmul %40, %42, %cst_32 {dimension_numbers = #tpu.dot_dimension_numbers<[1], [0], [0], [1], [0, 0, 1, 1], [], []>} : vector<256x4xbf16>, vector<4x128xbf16>, vector<256x128xf32> -> vector<256x128xf32>
    %44 = arith.addf %38, %43 : vector<256x128xf32>
    %45 = vector.extract_strided_slice %1 {offsets = [2, 1, 0], sizes = [16, 16, 4], strides = [1, 1, 1]} : vector<18x18x4xbf16> to vector<16x16x4xbf16>
    %46 = vector.shape_cast %45 : vector<16x16x4xbf16> to vector<256x4xbf16>
    %c0_33 = arith.constant 0 : index
    %c7 = arith.constant 7 : index
    %c0_34 = arith.constant 0 : index
    %c0_35 = arith.constant 0 : index
    %47 = vector.load %arg3[%c0_33, %c7, %c0_34, %c0_35] : memref<1x9x4x128xbf16, #tpu.memory_space<vmem>>, vector<1x1x4x128xbf16>
    %48 = vector.shape_cast %47 : vector<1x1x4x128xbf16> to vector<4x128xbf16>
    %cst_36 = arith.constant dense<0.000000e+00> : vector<256x128xf32>
    %49 = tpu.matmul %46, %48, %cst_36 {dimension_numbers = #tpu.dot_dimension_numbers<[1], [0], [0], [1], [0, 0, 1, 1], [], []>} : vector<256x4xbf16>, vector<4x128xbf16>, vector<256x128xf32> -> vector<256x128xf32>
    %50 = arith.addf %44, %49 : vector<256x128xf32>
    %51 = vector.extract_strided_slice %1 {offsets = [2, 2, 0], sizes = [16, 16, 4], strides = [1, 1, 1]} : vector<18x18x4xbf16> to vector<16x16x4xbf16>
    %52 = vector.shape_cast %51 : vector<16x16x4xbf16> to vector<256x4xbf16>
    %c0_37 = arith.constant 0 : index
    %c8 = arith.constant 8 : index
    %c0_38 = arith.constant 0 : index
    %c0_39 = arith.constant 0 : index
    %53 = vector.load %arg3[%c0_37, %c8, %c0_38, %c0_39] : memref<1x9x4x128xbf16, #tpu.memory_space<vmem>>, vector<1x1x4x128xbf16>
    %54 = vector.shape_cast %53 : vector<1x1x4x128xbf16> to vector<4x128xbf16>
    %cst_40 = arith.constant dense<0.000000e+00> : vector<256x128xf32>
    %55 = tpu.matmul %52, %54, %cst_40 {dimension_numbers = #tpu.dot_dimension_numbers<[1], [0], [0], [1], [0, 0, 1, 1], [], []>} : vector<256x4xbf16>, vector<4x128xbf16>, vector<256x128xf32> -> vector<256x128xf32>
    %56 = arith.addf %50, %55 : vector<256x128xf32>
    %c0_41 = arith.constant 0 : index
    %c0_42 = arith.constant 0 : index
    %c0_43 = arith.constant 0 : index
    %57 = vector.load %arg4[%c0_41, %c0_42, %c0_43] : memref<1x1x128xf32, #tpu.memory_space<vmem>>, vector<1x1x128xf32>
    %58 = vector.shape_cast %57 : vector<1x1x128xf32> to vector<1x128xf32>
    %59 = vector.broadcast %58 : vector<1x128xf32> to vector<256x128xf32>
    %60 = arith.addf %56, %59 : vector<256x128xf32>
    %cst_44 = arith.constant 3.000000e+00 : f32
    %61 = vector.broadcast %cst_44 : f32 to vector<256x128xf32>
    %62 = arith.addf %60, %61 : vector<256x128xf32>
    %cst_45 = arith.constant 0.000000e+00 : f32
    %cst_46 = arith.constant 6.000000e+00 : f32
    %63 = vector.broadcast %cst_45 : f32 to vector<256x128xf32>
    %64 = arith.maximumf %63, %62 : vector<256x128xf32>
    %65 = vector.broadcast %cst_46 : f32 to vector<256x128xf32>
    %66 = arith.minimumf %65, %64 : vector<256x128xf32>
    %67 = arith.mulf %60, %66 : vector<256x128xf32>
    %cst_47 = arith.constant 0.166666672 : f32
    %68 = vector.broadcast %cst_47 : f32 to vector<256x128xf32>
    %69 = arith.mulf %67, %68 : vector<256x128xf32>
    %c0_48 = arith.constant 0 : index
    %c0_49 = arith.constant 0 : index
    %c0_50 = arith.constant 0 : index
    %70 = vector.load %arg5[%c0_48, %c0_49, %c0_50] : memref<1x256x128xf32, #tpu.memory_space<vmem>>, vector<1x256x128xf32>
    %71 = vector.shape_cast %70 : vector<1x256x128xf32> to vector<256x128xf32>
    %72 = vector.shape_cast %69 : vector<256x128xf32> to vector<1x256x128xf32>
    tpu.vector_store %arg5[%c0_48, %c0_49, %c0_50], %72 {strides = array<i32>} : memref<1x256x128xf32, #tpu.memory_space<vmem>>, vector<1x256x128xf32>,
    return
  }
  func.func @transform_0(%arg0: i32, %arg1: i32) -> (i32, i32, i32, i32, i32) {
    %c0_i32 = arith.constant 0 : i32
    %c0_i32_0 = arith.constant 0 : i32
    %c0_i32_1 = arith.constant 0 : i32
    %c0_i32_2 = arith.constant 0 : i32
    return %arg0, %arg1, %c0_i32, %c0_i32_0, %c0_i32_1 : i32, i32, i32, i32, i32
  }
  func.func @transform_1(%arg0: i32, %arg1: i32) -> (i32, i32, i32, i32) {
    %c0_i32 = arith.constant 0 : i32
    %c0_i32_0 = arith.constant 0 : i32
    %c0_i32_1 = arith.constant 0 : i32
    %c0_i32_2 = arith.constant 0 : i32
    return %arg0, %c0_i32, %c0_i32_0, %c0_i32_1 : i32, i32, i32, i32
  }
  func.func @transform_2(%arg0: i32, %arg1: i32) -> (i32, i32, i32) {
    %c0_i32 = arith.constant 0 : i32
    %c0_i32_0 = arith.constant 0 : i32
    %c0_i32_1 = arith.constant 0 : i32
    return %arg0, %c0_i32, %c0_i32_0 : i32, i32, i32
  }
  func.func @transform_3(%arg0: i32, %arg1: i32) -> (i32, i32, i32) {
    %c0_i32 = arith.constant 0 : i32
    %c0_i32_0 = arith.constant 0 : i32
    return %arg1, %c0_i32, %arg0 : i32, i32, i32
  }
}

</mosaic_0001>

<llo_original>
// kernel: tpu_custom_call.1
$region0: #{tpu_custom_call.1}
  #allocation0 [shape = 'u32[]', space=smem, size = 0x4, offset = 0x4, fixed_abs, tag = 'smem constant byte address 0x4 - core index']
  #allocation1 [shape = 'u32[144,128]{1,0:T(1,128)}', space=vmem, size = 0x12000, scoped, tag = 'internal scratch']
  %s0 = inlined_call_operand.vmem [shape: bf16[1,2,18,18,4], index: 0, kind: input, shape index: {}]
  %s1 = inlined_call_operand.vmem [shape: bf16[1,9,4,128], index: 1, kind: input, shape index: {}]
  %s2 = inlined_call_operand.vmem [shape: f32[1,1,128], index: 2, kind: input, shape index: {}]
  %s3 = inlined_call_operand.hbm [shape: f32[2,256,128], index: 3, kind: output, shape index: {}]
  %s4 = sld [smem:[#allocation0]]
  $region45: #{tpu_custom_call.1} parent=0
    _
  %s6 = ssub.s32 1, %s4
  %s7 = scalar_select 0, %s6, %s4
  $region1: #{tpu_custom_call.1} parent=0
    #allocation2 [shape = 'u8[262144]{0}', space=vmem, size = 0x40000, scoped, tag = 'output window, operand 0']
    #allocation3 [shape = 's32[2]{0}', space=sflag, size = 0x8, scoped, tag = 'scoped memory for tpu_custom_call.1']
    %8 = vsyncpa [#allocation3], 0
    %s9 = scalar_lea.sflag [#allocation3], 1
    %10 = vsyncpa %s9, 0
    loop: start=0, step=1, limit=4
    $region2: #{tpu_custom_call.1} parent=1 // loop_pre_header
      _
    $region3: #{tpu_custom_call.1} parent=1 // loop_header
      %s12 = sphi 0, %s16
      %p13 = scmp.ge.s32.totalorder %s12, 4
      %s19 = sphi 0, %s31
      %s20 = sphi 0, %s27
      %s21 = sphi 0, %s19
      %s22 = sphi 0, %s20
      %s23 = sphi 0, %s21
      %s24 = sphi 0, %s22
      %s36 = sphi 0, %s38
      %s39 = sphi 0, %s36
      %s40 = sphi 0, %s39
      %s56 = sphi 0, %s40
      %s62 = sphi 0, %s64
      %s65 = sphi 0, %s62
      %s66 = sphi 0, %s65
      %s82 = sphi 0, %s66
      %s88 = sphi 0, %s90
      %s91 = sphi 0, %s88
      %s92 = sphi 0, %s91
      %s108 = sphi 0, %s92
      %s116 = sphi 0, %s118
      %s119 = sphi 0, %s116
      %s120 = sphi 0, %s119
      %s136 = sphi 0, %s120
    $region4: #{tpu_custom_call.1} parent=1 // loop_header_branch
      %15 = sbr.rel (%p13) target = $region8
    $region5: #{tpu_custom_call.1} parent=1 // loop_body
      %s17 = ssub.s32 %s12, 1
      %s18 = ssub.s32 %s12, 2
      %s25 = sadd.s32 1, %s20
      %p26 = scmp.ge.s32.totalorder %s25, 2
      %s27 = scalar_select %p26, 0, %s25
      %s28 = sadd.s32 1, %s19
      %s29 = scalar_select %p26, %s28, %s19
      %p30 = scmp.ge.s32.totalorder %s29, 1
      %s31 = scalar_select %p30, 0, %s29
      %s32 = ssub.s32 %s19, %s31
      %s33 = ssub.s32 %s20, %s27
      %s34 = sor.u32 %s32, %s33
      %p35 = scmp.eq.s32.totalorder %s34, 0
      %s37 = sadd.s32 %s36, 1
      %s38 = scalar_select %p35, %s36, %s37
      %p41 = pneg %p35
      %p42 = scmp.eq.s32.totalorder %s12, 1
      %p43 = por %p41, %p42
      %p44 = scmp.ne.s32.totalorder %s36, %s39
      %p45 = scmp.eq.s32.totalorder %s12, 0
      %p46 = por %p44, %p45
      %p47 = scmp.ne.s32.totalorder %s36, %s39
      %p48 = scmp.eq.s32.totalorder %s17, 1
      %p49 = por %p47, %p48
      %p50 = scmp.ne.s32.totalorder %s39, %s40
      %p51 = scmp.eq.s32.totalorder %s17, 0
      %p52 = por %p50, %p51
      %p53 = scmp.ne.s32.totalorder %s39, %s40
      %p54 = scmp.eq.s32.totalorder %s18, 1
      %p55 = por %p53, %p54
      %p57 = scmp.ne.s32.totalorder %s40, %s56
      %p58 = scmp.eq.s32.totalorder %s18, 0
      %p59 = por %p57, %p58
      %s60 = ssub.s32 %s19, %s31
      %p61 = scmp.eq.s32.totalorder %s60, 0
      %s63 = sadd.s32 %s62, 1
      %s64 = scalar_select %p61, %s62, %s63
      %p67 = pneg %p61
      %p68 = scmp.eq.s32.totalorder %s12, 1
      %p69 = por %p67, %p68
      %p70 = scmp.ne.s32.totalorder %s62, %s65
      %p71 = scmp.eq.s32.totalorder %s12, 0
      %p72 = por %p70, %p71
      %p73 = scmp.ne.s32.totalorder %s62, %s65
      %p74 = scmp.eq.s32.totalorder %s17, 1
      %p75 = por %p73, %p74
      %p76 = scmp.ne.s32.totalorder %s65, %s66
      %p77 = scmp.eq.s32.totalorder %s17, 0
      %p78 = por %p76, %p77
      %p79 = scmp.ne.s32.totalorder %s65, %s66
      %p80 = scmp.eq.s32.totalorder %s18, 1
      %p81 = por %p79, %p80
      %p83 = scmp.ne.s32.totalorder %s66, %s82
      %p84 = scmp.eq.s32.totalorder %s18, 0
      %p85 = por %p83, %p84
      %s86 = ssub.s32 %s19, %s31
      %p87 = scmp.eq.s32.totalorder %s86, 0
      %s89 = sadd.s32 %s88, 1
      %s90 = scalar_select %p87, %s88, %s89
      %p93 = pneg %p87
      %p94 = scmp.eq.s32.totalorder %s12, 1
      %p95 = por %p93, %p94
      %p96 = scmp.ne.s32.totalorder %s88, %s91
      %p97 = scmp.eq.s32.totalorder %s12, 0
      %p98 = por %p96, %p97
      %p99 = scmp.ne.s32.totalorder %s88, %s91
      %p100 = scmp.eq.s32.totalorder %s17, 1
      %p101 = por %p99, %p100
      %p102 = scmp.ne.s32.totalorder %s91, %s92
      %p103 = scmp.eq.s32.totalorder %s17, 0
      %p104 = por %p102, %p103
      %p105 = scmp.ne.s32.totalorder %s91, %s92
      %p106 = scmp.eq.s32.totalorder %s18, 1
      %p107 = por %p105, %p106
      %p109 = scmp.ne.s32.totalorder %s92, %s108
      %p110 = scmp.eq.s32.totalorder %s18, 0
      %p111 = por %p109, %p110
      %s112 = ssub.s32 %s20, %s27
      %s113 = ssub.s32 %s19, %s31
      %s114 = sor.u32 %s112, %s113
      %p115 = scmp.eq.s32.totalorder %s114, 0
      %s117 = sadd.s32 %s116, 1
      %s118 = scalar_select %p115, %s116, %s117
      %p121 = pneg %p115
      %p122 = scmp.eq.s32.totalorder %s12, 1
      %p123 = por %p121, %p122
      %p124 = scmp.ne.s32.totalorder %s116, %s119
      %p125 = scmp.eq.s32.totalorder %s12, 0
      %p126 = por %p124, %p125
      %p127 = scmp.ne.s32.totalorder %s116, %s119
      %p128 = scmp.eq.s32.totalorder %s17, 1
      %p129 = por %p127, %p128
      %p130 = scmp.ne.s32.totalorder %s119, %s120
      %p131 = scmp.eq.s32.totalorder %s17, 0
      %p132 = por %p130, %p131
      %p133 = scmp.ne.s32.totalorder %s119, %s120
      %p134 = scmp.eq.s32.totalorder %s18, 1
      %p135 = por %p133, %p134
      %p137 = scmp.ne.s32.totalorder %s120, %s136
      %p138 = scmp.eq.s32.totalorder %s18, 0
      %p139 = por %p137, %p138
      %p140 = scmp.le.s32.totalorder 1, %s12
      %p141 = scmp.lt.s32.totalorder %s12, 3
      %p142 = pnand %p140, %p141
      %p143 = pneg %p142
      // Predicated region
      $region9: #{tpu_custom_call.1} parent=5 // pred_check
        _
      $region10: #{tpu_custom_call.1} parent=5 // pred_check_branch
        %145 = sbr.rel (%p142) target = $region12
      $region11: #{tpu_custom_call.1} parent=5 // pred_region
        %s146 = ssub.s32 %s12, 1
        // Predicated region
        $region13: #{tpu_custom_call.1} parent=11 // pred_check
          %p147 = pneg %p78
        $region14: #{tpu_custom_call.1} parent=11 // pred_check_branch
          %149 = sbr.rel (%p147) target = $region16
        $region15: #{tpu_custom_call.1} parent=11 // pred_region
          %p150 = scmp.lt.s32.totalorder %s21, 0
          %s151 = scalar_select %p150, %s21, 0
          %s152 = smul.addr %s151, 9
          %s153 = smul.addr %s152, 2
          %s154 = scalar_lea.vmem %s1, %s153
        $region16: #{tpu_custom_call.1} parent=11 // pred_fallthru
          _
        // Predicated region
        $region17: #{tpu_custom_call.1} parent=11 // pred_check
          %p155 = pneg %p104
        $region18: #{tpu_custom_call.1} parent=11 // pred_check_branch
          %157 = sbr.rel (%p155) target = $region20
        $region19: #{tpu_custom_call.1} parent=11 // pred_region
          %p158 = scmp.lt.s32.totalorder %s21, 0
          %s159 = scalar_select %p158, %s21, 0
          %s160 = scalar_lea.vmem %s2, %s159
        $region20: #{tpu_custom_call.1} parent=11 // pred_fallthru
          _
      $region12: #{tpu_custom_call.1} parent=5 // pred_fallthru
        _
      %p161 = scmp.lt.s32.totalorder %s12, 2
      // Predicated region
      $region21: #{tpu_custom_call.1} parent=5 // pred_check
        %p162 = pneg %p161
      $region22: #{tpu_custom_call.1} parent=5 // pred_check_branch
        %164 = sbr.rel (%p162) target = $region24
      $region23: #{tpu_custom_call.1} parent=5 // pred_region
        // Predicated region
        $region25: #{tpu_custom_call.1} parent=23 // pred_check
          %p165 = pneg %p46
        $region26: #{tpu_custom_call.1} parent=23 // pred_check_branch
          %167 = sbr.rel (%p165) target = $region28
        $region27: #{tpu_custom_call.1} parent=23 // pred_region
          %p168 = scmp.lt.s32.totalorder %s19, 0
          %s169 = scalar_select %p168, %s19, 0
          %p170 = scmp.lt.s32.totalorder %s20, 1
          %s171 = scalar_select %p170, %s20, 1
          %s172 = smul.addr %s171, 54
          %s173 = smul.addr %s169, 108
          %s174 = sadd.s32 %s172, %s173
          %s175 = smul.addr %s174, 4
          %s176 = scalar_lea.vmem %s0, %s175
        $region28: #{tpu_custom_call.1} parent=23 // pred_fallthru
          _
      $region24: #{tpu_custom_call.1} parent=5 // pred_fallthru
        _
      %p177 = scmp.le.s32.totalorder 1, %s12
      %p178 = scmp.lt.s32.totalorder %s12, 3
      %p179 = pnand %p177, %p178
      %p180 = pneg %p179
      // Predicated region
      $region29: #{tpu_custom_call.1} parent=5 // pred_check
        _
      $region30: #{tpu_custom_call.1} parent=5 // pred_check_branch
        %182 = sbr.rel (%p179) target = $region32
      $region31: #{tpu_custom_call.1} parent=5 // pred_region
        %s183 = ssub.s32 %s12, 1
        %p184 = scmp.lt.s32.totalorder %s21, 0
        %s185 = scalar_select %p184, %s21, 0
        %p186 = scmp.lt.s32.totalorder %s22, 1
        %s187 = scalar_select %p186, %s22, 1
        %s188 = smul.addr %s187, 54
        %s189 = smul.addr %s185, 108
        %s190 = sadd.s32 %s188, %s189
        %s191 = smul.addr %s190, 4
        %s192 = scalar_lea.vmem %s0, %s191
        %p193 = pneg %p52
        %p194 = pneg %p49
        %p195 = scmp.lt.s32.totalorder %s21, 0
        %s196 = scalar_select %p195, %s21, 0
        %s197 = smul.addr %s196, 9
        %s198 = smul.addr %s197, 2
        %s199 = scalar_lea.vmem %s1, %s198
        %p200 = pneg %p78
        %p201 = pneg %p75
        %p202 = scmp.lt.s32.totalorder %s21, 0
        %s203 = scalar_select %p202, %s21, 0
        %s204 = scalar_lea.vmem %s2, %s203
        %p205 = pneg %p104
        %p206 = pneg %p101
        %p207 = pneg %p132
        %p208 = pneg %p129
        %s209 = sand.u32 %s119, 1
        %s210 = scalar_lea.sflag [#allocation3], %s209
        %s211 = sand.u32 %s119, 1
        %s212 = smul.addr %s211, 256
        %s213 = scalar_lea.vmem [#allocation2], %s212
        %p214 = scmp.lt.s32.totalorder %s21, 0
        %s215 = scalar_select %p214, %s21, 0
        %p216 = scmp.lt.s32.totalorder %s22, 1
        %s217 = scalar_select %p216, %s22, 1
        %s218 = smul.addr %s217, 54
        %s219 = smul.addr %s215, 108
        %s220 = sadd.s32 %s218, %s219
        %s221 = smul.addr %s220, 4
        %s222 = scalar_lea.vmem %s0, %s221
        %p223 = scmp.lt.s32.totalorder %s21, 0
        %s224 = scalar_select %p223, %s21, 0
        %s225 = smul.addr %s224, 9
        %s226 = smul.addr %s225, 2
        %s227 = scalar_lea.vmem %s1, %s226
        %p228 = scmp.lt.s32.totalorder %s21, 0
        %s229 = scalar_select %p228, %s21, 0
        %s230 = scalar_lea.vmem %s2, %s229
        %v232 = vld [vmem:[%s222] sm:$0xf]
        %v233 = vld [vmem:[%s222 + $0x4] sm:$0xf]
        %v234 = vld [vmem:[%s222 + $0x8] sm:$0x1]
        %v235 = vld [vmem:[%s222 + $0xc] sm:$0xf]
        %v236 = vld [vmem:[%s222 + $0x10] sm:$0xf]
        %v237 = vld [vmem:[%s222 + $0x14] sm:$0x1]
        %v238 = vld [vmem:[%s222 + $0x18] sm:$0xf]
        %v239 = vld [vmem:[%s222 + $0x1c] sm:$0xf]
        %v240 = vld [vmem:[%s222 + $0x20] sm:$0x1]
        %v241 = vld [vmem:[%s222 + $0x24] sm:$0xf]
        %v242 = vld [vmem:[%s222 + $0x28] sm:$0xf]
        %v243 = vld [vmem:[%s222 + $0x2c] sm:$0x1]
        %v244 = vld [vmem:[%s222 + $0x30] sm:$0xf]
        %v245 = vld [vmem:[%s222 + $0x34] sm:$0xf]
        %v246 = vld [vmem:[%s222 + $0x38] sm:$0x1]
        %v247 = vld [vmem:[%s222 + $0x3c] sm:$0xf]
        %v248 = vld [vmem:[%s222 + $0x40] sm:$0xf]
        %v249 = vld [vmem:[%s222 + $0x44] sm:$0x1]
        %v250 = vld [vmem:[%s222 + $0x48] sm:$0xf]
        %v251 = vld [vmem:[%s222 + $0x4c] sm:$0xf]
        %v252 = vld [vmem:[%s222 + $0x50] sm:$0x1]
        %v253 = vld [vmem:[%s222 + $0x54] sm:$0xf]
        %v254 = vld [vmem:[%s222 + $0x58] sm:$0xf]
        %v255 = vld [vmem:[%s222 + $0x5c] sm:$0x1]
        %v256 = vld [vmem:[%s222 + $0x60] sm:$0xf]
        %v257 = vld [vmem:[%s222 + $0x64] sm:$0xf]
        %v258 = vld [vmem:[%s222 + $0x68] sm:$0x1]
        %v259 = vld [vmem:[%s222 + $0x6c] sm:$0xf]
        %v260 = vld [vmem:[%s222 + $0x70] sm:$0xf]
        %v261 = vld [vmem:[%s222 + $0x74] sm:$0x1]
        %v262 = vld [vmem:[%s222 + $0x78] sm:$0xf]
        %v263 = vld [vmem:[%s222 + $0x7c] sm:$0xf]
        %v264 = vld [vmem:[%s222 + $0x80] sm:$0x1]
        %v265 = vld [vmem:[%s222 + $0x84] sm:$0xf]
        %v266 = vld [vmem:[%s222 + $0x88] sm:$0xf]
        %v267 = vld [vmem:[%s222 + $0x8c] sm:$0x1]
        %v268 = vld [vmem:[%s222 + $0x90] sm:$0xf]
        %v269 = vld [vmem:[%s222 + $0x94] sm:$0xf]
        %v270 = vld [vmem:[%s222 + $0x98] sm:$0x1]
        %v271 = vld [vmem:[%s222 + $0x9c] sm:$0xf]
        %v272 = vld [vmem:[%s222 + $0xa0] sm:$0xf]
        %v273 = vld [vmem:[%s222 + $0xa4] sm:$0x1]
        %v274 = vld [vmem:[%s222 + $0xa8] sm:$0xf]
        %v275 = vld [vmem:[%s222 + $0xac] sm:$0xf]
        %v276 = vld [vmem:[%s222 + $0xb0] sm:$0x1]
        %v277 = vld [vmem:[%s222 + $0xb4] sm:$0xf]
        %v278 = vld [vmem:[%s222 + $0xb8] sm:$0xf]
        %v279 = vld [vmem:[%s222 + $0xbc] sm:$0x1]
        %v280 = vld [vmem:[%s222 + $0xc0] sm:$0xf]
        %v281 = vld [vmem:[%s222 + $0xc4] sm:$0xf]
        %v282 = vld [vmem:[%s222 + $0xc8] sm:$0x1]
        %v283 = vld [vmem:[%s222 + $0xcc] sm:$0xf]
        %v284 = vld [vmem:[%s222 + $0xd0] sm:$0xf]
        %v285 = vld [vmem:[%s222 + $0xd4] sm:$0x1]
        %v286 = vld [vmem:[%s227] sm:$0x3]
        %vm287 = vsmask.f32 3328
        %vm288 = vsmask.f32 7440
        %vm289 = vmor %vm287, %vm288
        %v291 = vshrl.u32 %v232, 16
        %v293 = vrot.slane %v291, 4
        %v294 = vshll.u32 %v232, 16
        %v296 = vrot.slane %v294, 5
        %v297 = vor.u32 %v293, %v296
        %v298 = vrot.slane %v297, 4
        %v300 = vshll.u32 %v233, 16
        %v302 = vrot.slane %v300, 5
        %v303 = vsel %vm289, %v298, %v302
        %v304 = vshrl.u32 %v233, 16
        %v306 = vrot.slane %v304, 4
        %v307 = vor.u32 %v306, %v302
        %v308 = vrot.slane %v307, 4
        %v310 = vshll.u32 %v234, 16
        %v312 = vrot.slane %v310, 5
        %v313 = vsel %vm289, %v308, %v312
        %v315 = vshrl.u32 %v235, 16
        %v317 = vrot.slane %v315, 4
        %v318 = vshll.u32 %v235, 16
        %v320 = vrot.slane %v318, 5
        %v321 = vor.u32 %v317, %v320
        %v322 = vrot.slane %v321, 4
        %v324 = vshll.u32 %v236, 16
        %v326 = vrot.slane %v324, 5
        %v327 = vsel %vm289, %v322, %v326
        %v328 = vshrl.u32 %v236, 16
        %v330 = vrot.slane %v328, 4
        %v331 = vor.u32 %v330, %v326
        %v332 = vrot.slane %v331, 4
        %v334 = vshll.u32 %v237, 16
        %v336 = vrot.slane %v334, 5
        %v337 = vsel %vm289, %v332, %v336
        %v339 = vshrl.u32 %v238, 16
        %v341 = vrot.slane %v339, 4
        %v342 = vshll.u32 %v238, 16
        %v344 = vrot.slane %v342, 5
        %v345 = vor.u32 %v341, %v344
        %v346 = vrot.slane %v345, 4
        %v348 = vshll.u32 %v239, 16
        %v350 = vrot.slane %v348, 5
        %v351 = vsel %vm289, %v346, %v350
        %v352 = vshrl.u32 %v239, 16
        %v354 = vrot.slane %v352, 4
        %v355 = vor.u32 %v354, %v350
        %v356 = vrot.slane %v355, 4
        %v358 = vshll.u32 %v240, 16
        %v360 = vrot.slane %v358, 5
        %v361 = vsel %vm289, %v356, %v360
        %v363 = vshrl.u32 %v241, 16
        %v365 = vrot.slane %v363, 4
        %v366 = vshll.u32 %v241, 16
        %v368 = vrot.slane %v366, 5
        %v369 = vor.u32 %v365, %v368
        %v370 = vrot.slane %v369, 4
        %v372 = vshll.u32 %v242, 16
        %v374 = vrot.slane %v372, 5
        %v375 = vsel %vm289, %v370, %v374
        %v376 = vshrl.u32 %v242, 16
        %v378 = vrot.slane %v376, 4
        %v379 = vor.u32 %v378, %v374
        %v380 = vrot.slane %v379, 4
        %v382 = vshll.u32 %v243, 16
        %v384 = vrot.slane %v382, 5
        %v385 = vsel %vm289, %v380, %v384
        %v387 = vshrl.u32 %v244, 16
        %v389 = vrot.slane %v387, 4
        %v390 = vshll.u32 %v244, 16
        %v392 = vrot.slane %v390, 5
        %v393 = vor.u32 %v389, %v392
        %v394 = vrot.slane %v393, 4
        %v396 = vshll.u32 %v245, 16
        %v398 = vrot.slane %v396, 5
        %v399 = vsel %vm289, %v394, %v398
        %v400 = vshrl.u32 %v245, 16
        %v402 = vrot.slane %v400, 4
        %v403 = vor.u32 %v402, %v398
        %v404 = vrot.slane %v403, 4
        %v406 = vshll.u32 %v246, 16
        %v408 = vrot.slane %v406, 5
        %v409 = vsel %vm289, %v404, %v408
        %v411 = vshrl.u32 %v247, 16
        %v413 = vrot.slane %v411, 4
        %v414 = vshll.u32 %v247, 16
        %v416 = vrot.slane %v414, 5
        %v417 = vor.u32 %v413, %v416
        %v418 = vrot.slane %v417, 4
        %v420 = vshll.u32 %v248, 16
        %v422 = vrot.slane %v420, 5
        %v423 = vsel %vm289, %v418, %v422
        %v424 = vshrl.u32 %v248, 16
        %v426 = vrot.slane %v424, 4
        %v427 = vor.u32 %v426, %v422
        %v428 = vrot.slane %v427, 4
        %v430 = vshll.u32 %v249, 16
        %v432 = vrot.slane %v430, 5
        %v433 = vsel %vm289, %v428, %v432
        %v435 = vshrl.u32 %v250, 16
        %v437 = vrot.slane %v435, 4
        %v438 = vshll.u32 %v250, 16
        %v440 = vrot.slane %v438, 5
        %v441 = vor.u32 %v437, %v440
        %v442 = vrot.slane %v441, 4
        %v444 = vshll.u32 %v251, 16
        %v446 = vrot.slane %v444, 5
        %v447 = vsel %vm289, %v442, %v446
        %v448 = vshrl.u32 %v251, 16
        %v450 = vrot.slane %v448, 4
        %v451 = vor.u32 %v450, %v446
        %v452 = vrot.slane %v451, 4
        %v454 = vshll.u32 %v252, 16
        %v456 = vrot.slane %v454, 5
        %v457 = vsel %vm289, %v452, %v456
        %v459 = vshrl.u32 %v253, 16
        %v461 = vrot.slane %v459, 4
        %v462 = vshll.u32 %v253, 16
        %v464 = vrot.slane %v462, 5
        %v465 = vor.u32 %v461, %v464
        %v466 = vrot.slane %v465, 4
        %v468 = vshll.u32 %v254, 16
        %v470 = vrot.slane %v468, 5
        %v471 = vsel %vm289, %v466, %v470
        %v472 = vshrl.u32 %v254, 16
        %v474 = vrot.slane %v472, 4
        %v475 = vor.u32 %v474, %v470
        %v476 = vrot.slane %v475, 4
        %v478 = vshll.u32 %v255, 16
        %v480 = vrot.slane %v478, 5
        %v481 = vsel %vm289, %v476, %v480
        %v483 = vshrl.u32 %v256, 16
        %v485 = vrot.slane %v483, 4
        %v486 = vshll.u32 %v256, 16
        %v488 = vrot.slane %v486, 5
        %v489 = vor.u32 %v485, %v488
        %v490 = vrot.slane %v489, 4
        %v492 = vshll.u32 %v257, 16
        %v494 = vrot.slane %v492, 5
        %v495 = vsel %vm289, %v490, %v494
        %v496 = vshrl.u32 %v257, 16
        %v498 = vrot.slane %v496, 4
        %v499 = vor.u32 %v498, %v494
        %v500 = vrot.slane %v499, 4
        %v502 = vshll.u32 %v258, 16
        %v504 = vrot.slane %v502, 5
        %v505 = vsel %vm289, %v500, %v504
        %v507 = vshrl.u32 %v259, 16
        %v509 = vrot.slane %v507, 4
        %v510 = vshll.u32 %v259, 16
        %v512 = vrot.slane %v510, 5
        %v513 = vor.u32 %v509, %v512
        %v514 = vrot.slane %v513, 4
        %v516 = vshll.u32 %v260, 16
        %v518 = vrot.slane %v516, 5
        %v519 = vsel %vm289, %v514, %v518
        %v520 = vshrl.u32 %v260, 16
        %v522 = vrot.slane %v520, 4
        %v523 = vor.u32 %v522, %v518
        %v524 = vrot.slane %v523, 4
        %v526 = vshll.u32 %v261, 16
        %v528 = vrot.slane %v526, 5
        %v529 = vsel %vm289, %v524, %v528
        %v531 = vshrl.u32 %v262, 16
        %v533 = vrot.slane %v531, 4
        %v534 = vshll.u32 %v262, 16
        %v536 = vrot.slane %v534, 5
        %v537 = vor.u32 %v533, %v536
        %v538 = vrot.slane %v537, 4
        %v540 = vshll.u32 %v263, 16
        %v542 = vrot.slane %v540, 5
        %v543 = vsel %vm289, %v538, %v542
        %v544 = vshrl.u32 %v263, 16
        %v546 = vrot.slane %v544, 4
        %v547 = vor.u32 %v546, %v542
        %v548 = vrot.slane %v547, 4
        %v550 = vshll.u32 %v264, 16
        %v552 = vrot.slane %v550, 5
        %v553 = vsel %vm289, %v548, %v552
        %v555 = vshrl.u32 %v265, 16
        %v557 = vrot.slane %v555, 4
        %v558 = vshll.u32 %v265, 16
        %v560 = vrot.slane %v558, 5
        %v561 = vor.u32 %v557, %v560
        %v562 = vrot.slane %v561, 4
        %v564 = vshll.u32 %v266, 16
        %v566 = vrot.slane %v564, 5
        %v567 = vsel %vm289, %v562, %v566
        %v568 = vshrl.u32 %v266, 16
        %v570 = vrot.slane %v568, 4
        %v571 = vor.u32 %v570, %v566
        %v572 = vrot.slane %v571, 4
        %v574 = vshll.u32 %v267, 16
        %v576 = vrot.slane %v574, 5
        %v577 = vsel %vm289, %v572, %v576
        %v579 = vshrl.u32 %v268, 16
        %v581 = vrot.slane %v579, 4
        %v582 = vshll.u32 %v268, 16
        %v584 = vrot.slane %v582, 5
        %v585 = vor.u32 %v581, %v584
        %v586 = vrot.slane %v585, 4
        %v588 = vshll.u32 %v269, 16
        %v590 = vrot.slane %v588, 5
        %v591 = vsel %vm289, %v586, %v590
        %v592 = vshrl.u32 %v269, 16
        %v594 = vrot.slane %v592, 4
        %v595 = vor.u32 %v594, %v590
        %v596 = vrot.slane %v595, 4
        %v598 = vshll.u32 %v270, 16
        %v600 = vrot.slane %v598, 5
        %v601 = vsel %vm289, %v596, %v600
        %v603 = vshrl.u32 %v271, 16
        %v605 = vrot.slane %v603, 4
        %v606 = vshll.u32 %v271, 16
        %v608 = vrot.slane %v606, 5
        %v609 = vor.u32 %v605, %v608
        %v610 = vrot.slane %v609, 4
        %v612 = vshll.u32 %v272, 16
        %v614 = vrot.slane %v612, 5
        %v615 = vsel %vm289, %v610, %v614
        %v616 = vshrl.u32 %v272, 16
        %v618 = vrot.slane %v616, 4
        %v619 = vor.u32 %v618, %v614
        %v620 = vrot.slane %v619, 4
        %v622 = vshll.u32 %v273, 16
        %v624 = vrot.slane %v622, 5
        %v625 = vsel %vm289, %v620, %v624
        %v627 = vshrl.u32 %v274, 16
        %v629 = vrot.slane %v627, 4
        %v630 = vshll.u32 %v274, 16
        %v632 = vrot.slane %v630, 5
        %v633 = vor.u32 %v629, %v632
        %v634 = vrot.slane %v633, 4
        %v636 = vshll.u32 %v275, 16
        %v638 = vrot.slane %v636, 5
        %v639 = vsel %vm289, %v634, %v638
        %v640 = vshrl.u32 %v275, 16
        %v642 = vrot.slane %v640, 4
        %v643 = vor.u32 %v642, %v638
        %v644 = vrot.slane %v643, 4
        %v646 = vshll.u32 %v276, 16
        %v648 = vrot.slane %v646, 5
        %v649 = vsel %vm289, %v644, %v648
        %v651 = vshrl.u32 %v277, 16
        %v653 = vrot.slane %v651, 4
        %v654 = vshll.u32 %v277, 16
        %v656 = vrot.slane %v654, 5
        %v657 = vor.u32 %v653, %v656
        %v658 = vrot.slane %v657, 4
        %v660 = vshll.u32 %v278, 16
        %v662 = vrot.slane %v660, 5
        %v663 = vsel %vm289, %v658, %v662
        %v664 = vshrl.u32 %v278, 16
        %v666 = vrot.slane %v664, 4
        %v667 = vor.u32 %v666, %v662
        %v668 = vrot.slane %v667, 4
        %v670 = vshll.u32 %v279, 16
        %v672 = vrot.slane %v670, 5
        %v673 = vsel %vm289, %v668, %v672
        %s674 = scalar_lea.vmem %s227, 2
        %v675 = vld [vmem:[%s674] sm:$0x3]
        %v676 = vunpack.c.l.b16 %v303
        %v677 = vunpack.c.l.b16 %v313
        %v678 = vunpack.c.l.b16 %v327
        %v679 = vunpack.c.l.b16 %v337
        %v680 = vunpack.c.l.b16 %v351
        %v681 = vunpack.c.l.b16 %v361
        %v682 = vunpack.c.l.b16 %v375
        %v683 = vunpack.c.l.b16 %v385
        %v684 = vunpack.c.l.b16 %v399
        %v685 = vunpack.c.l.b16 %v409
        %v686 = vunpack.c.l.b16 %v423
        %v687 = vunpack.c.l.b16 %v433
        %v688 = vunpack.c.l.b16 %v447
        %v689 = vunpack.c.l.b16 %v457
        %v690 = vunpack.c.l.b16 %v471
        %v691 = vunpack.c.l.b16 %v481
        %v692 = vunpack.c.l.b16 %v495
        %v693 = vunpack.c.l.b16 %v505
        %v694 = vunpack.c.l.b16 %v519
        %v695 = vunpack.c.l.b16 %v529
        %v696 = vunpack.c.l.b16 %v543
        %v697 = vunpack.c.l.b16 %v553
        %v698 = vunpack.c.l.b16 %v567
        %v699 = vunpack.c.l.b16 %v577
        %v700 = vunpack.c.l.b16 %v591
        %v701 = vunpack.c.l.b16 %v601
        %v702 = vunpack.c.l.b16 %v615
        %v703 = vunpack.c.l.b16 %v625
        %v704 = vunpack.c.l.b16 %v639
        %v705 = vunpack.c.l.b16 %v649
        %v706 = vunpack.c.l.b16 %v663
        %v707 = vunpack.c.l.b16 %v673
        %v708 = vpack.c.b16 %v677, %v676
        %v709 = vpack.c.b16 %v679, %v678
        %v710 = vpack.c.b16 %v681, %v680
        %v711 = vpack.c.b16 %v683, %v682
        %v712 = vpack.c.b16 %v685, %v684
        %v713 = vpack.c.b16 %v687, %v686
        %v714 = vpack.c.b16 %v689, %v688
        %v715 = vpack.c.b16 %v691, %v690
        %v716 = vpack.c.b16 %v693, %v692
        %v717 = vpack.c.b16 %v695, %v694
        %v718 = vpack.c.b16 %v697, %v696
        %v719 = vpack.c.b16 %v699, %v698
        %v720 = vpack.c.b16 %v701, %v700
        %v721 = vpack.c.b16 %v703, %v702
        %v722 = vpack.c.b16 %v705, %v704
        %v723 = vpack.c.b16 %v707, %v706
        %vm724 = vcmask 31744
        %v726 = vsel %vm724, %v708, 0
        %v729 = vsel %vm724, %v709, 0
        %v732 = vsel %vm724, %v710, 0
        %v735 = vsel %vm724, %v711, 0
        %v738 = vsel %vm724, %v712, 0
        %v741 = vsel %vm724, %v713, 0
        %v744 = vsel %vm724, %v714, 0
        %v747 = vsel %vm724, %v715, 0
        %v750 = vsel %vm724, %v716, 0
        %v753 = vsel %vm724, %v717, 0
        %v756 = vsel %vm724, %v718, 0
        %v759 = vsel %vm724, %v719, 0
        %v762 = vsel %vm724, %v720, 0
        %v765 = vsel %vm724, %v721, 0
        %v768 = vsel %vm724, %v722, 0
        %v771 = vsel %vm724, %v723, 0
        %vm773 = vcmask 1041408
        %v775 = vsel %vm773, %v675, 0
        %777 = vmatprep.subr.bf16.mxu0 0
        %778 = vmatpush1.bf16.msra.mxu0 %v775
        %779 = vmatprep.subr.bf16.mxu0 0
        %780 = vmatpush1.bf16.msra.mxu0 0
        %781 = vmatprep.subr.bf16.mxu0 0
        %782 = vmatpush1.bf16.msra.mxu0 0
        %783 = vmatprep.subr.bf16.mxu0 0
        %784 = vmatpush1.bf16.msra.mxu0 0
        %785 = vmatprep.subr.bf16.mxu0 0
        %786 = vmatpush1.bf16.msra.mxu0 0
        %787 = vmatprep.subr.bf16.mxu0 0
        %788 = vmatpush1.bf16.msra.mxu0 0
        %789 = vmatprep.subr.bf16.mxu0 0
        %790 = vmatpush1.bf16.msra.mxu0 0
        %791 = vmatprep.subr.bf16.mxu0 0
        %792 = vmatpush1.bf16.msra.mxu0 0
        %793 = vmatprep.subr.bf16.mxu0 0
        %794 = vmatpush1.bf16.msra.mxu0 0
        %795 = vmatprep.subr.bf16.mxu0 0
        %796 = vmatpush1.bf16.msra.mxu0 0
        %797 = vmatprep.subr.bf16.mxu0 0
        %798 = vmatpush1.bf16.msra.mxu0 0
        %799 = vmatprep.subr.bf16.mxu0 0
        %800 = vmatpush1.bf16.msra.mxu0 0
        %801 = vmatprep.subr.bf16.mxu0 0
        %802 = vmatpush1.bf16.msra.mxu0 0
        %803 = vmatprep.subr.bf16.mxu0 0
        %804 = vmatpush1.bf16.msra.mxu0 0
        %805 = vmatprep.subr.bf16.mxu0 0
        %806 = vmatpush1.bf16.msra.mxu0 0
        %807 = vmatprep.subr.bf16.mxu0 0
        %808 = vmatpush1.bf16.msra.mxu0 0
        %809 = vmatprep.mubr.bf16.mxu0 0
        %810 = vmatmul.mubr.bf16.gmra.mrb[0].mxu0 %v726
        %v811 = vpop.f32.mrb[0].mxu0
        %v812 = vadd.f32 0.0, %v811
        %v813 = vpop.f32.mrb[0].mxu0
        %v814 = vpop.f32.mrb[0].mxu0
        %v815 = vadd.f32 0.0, %v814
        %v816 = vpop.f32.mrb[0].mxu0
        %817 = vmatprep.mubr.bf16.mxu0 0
        %818 = vmatmul.mubr.bf16.gmra.mrb[0].mxu0 %v729
        %v819 = vpop.f32.mrb[0].mxu0
        %v820 = vadd.f32 0.0, %v819
        %v821 = vpop.f32.mrb[0].mxu0
        %v822 = vpop.f32.mrb[0].mxu0
        %v823 = vadd.f32 0.0, %v822
        %v824 = vpop.f32.mrb[0].mxu0
        %825 = vmatprep.mubr.bf16.mxu0 0
        %826 = vmatmul.mubr.bf16.gmra.mrb[0].mxu0 %v732
        %v827 = vpop.f32.mrb[0].mxu0
        %v828 = vadd.f32 0.0, %v827
        %v829 = vpop.f32.mrb[0].mxu0
        %v830 = vpop.f32.mrb[0].mxu0
        %v831 = vadd.f32 0.0, %v830
        %v832 = vpop.f32.mrb[0].mxu0
        %833 = vmatprep.mubr.bf16.mxu0 0
        %834 = vmatmul.mubr.bf16.gmra.mrb[0].mxu0 %v735
        %v835 = vpop.f32.mrb[0].mxu0
        %v836 = vadd.f32 0.0, %v835
        %v837 = vpop.f32.mrb[0].mxu0
        %v838 = vpop.f32.mrb[0].mxu0
        %v839 = vadd.f32 0.0, %v838
        %v840 = vpop.f32.mrb[0].mxu0
        %841 = vmatprep.mubr.bf16.mxu0 0
        %842 = vmatmul.mubr.bf16.gmra.mrb[0].mxu0 %v738
        %v843 = vpop.f32.mrb[0].mxu0
        %v844 = vadd.f32 0.0, %v843
        %v845 = vpop.f32.mrb[0].mxu0
        %v846 = vpop.f32.mrb[0].mxu0
        %v847 = vadd.f32 0.0, %v846
        %v848 = vpop.f32.mrb[0].mxu0
        %849 = vmatprep.mubr.bf16.mxu0 0
        %850 = vmatmul.mubr.bf16.gmra.mrb[0].mxu0 %v741
        %v851 = vpop.f32.mrb[0].mxu0
        %v852 = vadd.f32 0.0, %v851
        %v853 = vpop.f32.mrb[0].mxu0
        %v854 = vpop.f32.mrb[0].mxu0
        %v855 = vadd.f32 0.0, %v854
        %v856 = vpop.f32.mrb[0].mxu0
        %857 = vmatprep.mubr.bf16.mxu0 0
        %858 = vmatmul.mubr.bf16.gmra.mrb[0].mxu0 %v744
        %v859 = vpop.f32.mrb[0].mxu0
        %v860 = vadd.f32 0.0, %v859
        %v861 = vpop.f32.mrb[0].mxu0
        %v862 = vpop.f32.mrb[0].mxu0
        %v863 = vadd.f32 0.0, %v862
        %v864 = vpop.f32.mrb[0].mxu0
        %865 = vmatprep.mubr.bf16.mxu0 0
        %866 = vmatmul.mubr.bf16.gmra.mrb[0].mxu0 %v747
        %v867 = vpop.f32.mrb[0].mxu0
        %v868 = vadd.f32 0.0, %v867
        %v869 = vpop.f32.mrb[0].mxu0
        %v870 = vpop.f32.mrb[0].mxu0
        %v871 = vadd.f32 0.0, %v870
        %v872 = vpop.f32.mrb[0].mxu0
        %873 = vmatprep.mubr.bf16.mxu0 0
        %874 = vmatmul.mubr.bf16.gmra.mrb[0].mxu0 %v750
        %v875 = vpop.f32.mrb[0].mxu0
        %v876 = vadd.f32 0.0, %v875
        %v877 = vpop.f32.mrb[0].mxu0
        %v878 = vpop.f32.mrb[0].mxu0
        %v879 = vadd.f32 0.0, %v878
        %v880 = vpop.f32.mrb[0].mxu0
        %881 = vmatprep.mubr.bf16.mxu0 0
        %882 = vmatmul.mubr.bf16.gmra.mrb[0].mxu0 %v753
        %v883 = vpop.f32.mrb[0].mxu0
        %v884 = vadd.f32 0.0, %v883
        %v885 = vpop.f32.mrb[0].mxu0
        %v886 = vpop.f32.mrb[0].mxu0
        %v887 = vadd.f32 0.0, %v886
        %v888 = vpop.f32.mrb[0].mxu0
        %889 = vmatprep.mubr.bf16.mxu0 0
        %890 = vmatmul.mubr.bf16.gmra.mrb[0].mxu0 %v756
        %v891 = vpop.f32.mrb[0].mxu0
        %v892 = vadd.f32 0.0, %v891
        %v893 = vpop.f32.mrb[0].mxu0
        %v894 = vpop.f32.mrb[0].mxu0
        %v895 = vadd.f32 0.0, %v894
        %v896 = vpop.f32.mrb[0].mxu0
        %897 = vmatprep.mubr.bf16.mxu0 0
        %898 = vmatmul.mubr.bf16.gmra.mrb[0].mxu0 %v759
        %v899 = vpop.f32.mrb[0].mxu0
        %v900 = vadd.f32 0.0, %v899
        %v901 = vpop.f32.mrb[0].mxu0
        %v902 = vpop.f32.mrb[0].mxu0
        %v903 = vadd.f32 0.0, %v902
        %v904 = vpop.f32.mrb[0].mxu0
        %905 = vmatprep.mubr.bf16.mxu0 0
        %906 = vmatmul.mubr.bf16.gmra.mrb[0].mxu0 %v762
        %v907 = vpop.f32.mrb[0].mxu0
        %v908 = vadd.f32 0.0, %v907
        %v909 = vpop.f32.mrb[0].mxu0
        %v910 = vpop.f32.mrb[0].mxu0
        %v911 = vadd.f32 0.0, %v910
        %v912 = vpop.f32.mrb[0].mxu0
        %913 = vmatprep.mubr.bf16.mxu0 0
        %914 = vmatmul.mubr.bf16.gmra.mrb[0].mxu0 %v765
        %v915 = vpop.f32.mrb[0].mxu0
        %v916 = vadd.f32 0.0, %v915
        %v917 = vpop.f32.mrb[0].mxu0
        %v918 = vpop.f32.mrb[0].mxu0
        %v919 = vadd.f32 0.0, %v918
        %v920 = vpop.f32.mrb[0].mxu0
        %921 = vmatprep.mubr.bf16.mxu0 0
        %922 = vmatmul.mubr.bf16.gmra.mrb[0].mxu0 %v768
        %v923 = vpop.f32.mrb[0].mxu0
        %v924 = vadd.f32 0.0, %v923
        %v925 = vpop.f32.mrb[0].mxu0
        %v926 = vpop.f32.mrb[0].mxu0
        %v927 = vadd.f32 0.0, %v926
        %v928 = vpop.f32.mrb[0].mxu0
        %929 = vmatprep.mubr.bf16.mxu0 0
        %930 = vmatmul.mubr.bf16.gmra.mrb[0].mxu0 %v771
        %v931 = vpop.f32.mrb[0].mxu0
        %v932 = vadd.f32 0.0, %v931
        %v933 = vpop.f32.mrb[0].mxu0
        %v934 = vpop.f32.mrb[0].mxu0
        %v935 = vadd.f32 0.0, %v934
        %v936 = vpop.f32.mrb[0].mxu0
        %937 = vdwg.mxu0
        %v970 = vunpack.c.l.b16 %v232
        %v971 = vunpack.c.l.b16 %v233
        %v972 = vunpack.c.l.b16 %v235
        %v973 = vunpack.c.l.b16 %v236
        %v974 = vunpack.c.l.b16 %v238
        %v975 = vunpack.c.l.b16 %v239
        %v976 = vunpack.c.l.b16 %v241
        %v977 = vunpack.c.l.b16 %v242
        %v978 = vunpack.c.l.b16 %v244
        %v979 = vunpack.c.l.b16 %v245
        %v980 = vunpack.c.l.b16 %v247
        %v981 = vunpack.c.l.b16 %v248
        %v982 = vunpack.c.l.b16 %v250
        %v983 = vunpack.c.l.b16 %v251
        %v984 = vunpack.c.l.b16 %v253
        %v985 = vunpack.c.l.b16 %v254
        %v986 = vunpack.c.l.b16 %v256
        %v987 = vunpack.c.l.b16 %v257
        %v988 = vunpack.c.l.b16 %v259
        %v989 = vunpack.c.l.b16 %v260
        %v990 = vunpack.c.l.b16 %v262
        %v991 = vunpack.c.l.b16 %v263
        %v992 = vunpack.c.l.b16 %v265
        %v993 = vunpack.c.l.b16 %v266
        %v994 = vunpack.c.l.b16 %v268
        %v995 = vunpack.c.l.b16 %v269
        %v996 = vunpack.c.l.b16 %v271
        %v997 = vunpack.c.l.b16 %v272
        %v998 = vunpack.c.l.b16 %v274
        %v999 = vunpack.c.l.b16 %v275
        %v1000 = vunpack.c.l.b16 %v277
        %v1001 = vunpack.c.l.b16 %v278
        %v1002 = vpack.c.b16 %v971, %v970
        %v1003 = vpack.c.b16 %v973, %v972
        %v1004 = vpack.c.b16 %v975, %v974
        %v1005 = vpack.c.b16 %v977, %v976
        %v1006 = vpack.c.b16 %v979, %v978
        %v1007 = vpack.c.b16 %v981, %v980
        %v1008 = vpack.c.b16 %v983, %v982
        %v1009 = vpack.c.b16 %v985, %v984
        %v1010 = vpack.c.b16 %v987, %v986
        %v1011 = vpack.c.b16 %v989, %v988
        %v1012 = vpack.c.b16 %v991, %v990
        %v1013 = vpack.c.b16 %v993, %v992
        %v1014 = vpack.c.b16 %v995, %v994
        %v1015 = vpack.c.b16 %v997, %v996
        %v1016 = vpack.c.b16 %v999, %v998
        %v1017 = vpack.c.b16 %v1001, %v1000
        %v1019 = vsel %vm724, %v1002, 0
        %v1022 = vsel %vm724, %v1003, 0
        %v1025 = vsel %vm724, %v1004, 0
        %v1028 = vsel %vm724, %v1005, 0
        %v1031 = vsel %vm724, %v1006, 0
        %v1034 = vsel %vm724, %v1007, 0
        %v1037 = vsel %vm724, %v1008, 0
        %v1040 = vsel %vm724, %v1009, 0
        %v1043 = vsel %vm724, %v1010, 0
        %v1046 = vsel %vm724, %v1011, 0
        %v1049 = vsel %vm724, %v1012, 0
        %v1052 = vsel %vm724, %v1013, 0
        %v1055 = vsel %vm724, %v1014, 0
        %v1058 = vsel %vm724, %v1015, 0
        %v1061 = vsel %vm724, %v1016, 0
        %v1064 = vsel %vm724, %v1017, 0
        %v1067 = vsel %vm773, %v286, 0
        %1069 = vmatprep.subr.bf16.mxu0 0
        %1070 = vmatpush1.bf16.msra.mxu0 %v1067
        %1071 = vmatprep.subr.bf16.mxu0 0
        %1072 = vmatpush1.bf16.msra.mxu0 0
        %1073 = vmatprep.subr.bf16.mxu0 0
        %1074 = vmatpush1.bf16.msra.mxu0 0
        %1075 = vmatprep.subr.bf16.mxu0 0
        %1076 = vmatpush1.bf16.msra.mxu0 0
        %1077 = vmatprep.subr.bf16.mxu0 0
        %1078 = vmatpush1.bf16.msra.mxu0 0
        %1079 = vmatprep.subr.bf16.mxu0 0
        %1080 = vmatpush1.bf16.msra.mxu0 0
        %1081 = vmatprep.subr.bf16.mxu0 0
        %1082 = vmatpush1.bf16.msra.mxu0 0
        %1083 = vmatprep.subr.bf16.mxu0 0
        %1084 = vmatpush1.bf16.msra.mxu0 0
        %1085 = vmatprep.subr.bf16.mxu0 0
        %1086 = vmatpush1.bf16.msra.mxu0 0
        %1087 = vmatprep.subr.bf16.mxu0 0
        %1088 = vmatpush1.bf16.msra.mxu0 0
        %1089 = vmatprep.subr.bf16.mxu0 0
        %1090 = vmatpush1.bf16.msra.mxu0 0
        %1091 = vmatprep.subr.bf16.mxu0 0
        %1092 = vmatpush1.bf16.msra.mxu0 0
        %1093 = vmatprep.subr.bf16.mxu0 0
        %1094 = vmatpush1.bf16.msra.mxu0 0
        %1095 = vmatprep.subr.bf16.mxu0 0
        %1096 = vmatpush1.bf16.msra.mxu0 0
        %1097 = vmatprep.subr.bf16.mxu0 0
        %1098 = vmatpush1.bf16.msra.mxu0 0
        %1099 = vmatprep.subr.bf16.mxu0 0
        %1100 = vmatpush1.bf16.msra.mxu0 0
        %1101 = vmatprep.mubr.bf16.mxu0 0
        %1102 = vmatmul.mubr.bf16.gmra.mrb[0].mxu0 %v1019
        %v1103 = vpop.f32.mrb[0].mxu0
        %v1104 = vadd.f32 %v812, %v1103
        %v1105 = vpop.f32.mrb[0].mxu0
        %v1106 = vpop.f32.mrb[0].mxu0
        %v1107 = vadd.f32 %v815, %v1106
        %v1108 = vpop.f32.mrb[0].mxu0
        %1109 = vmatprep.mubr.bf16.mxu0 0
        %1110 = vmatmul.mubr.bf16.gmra.mrb[0].mxu0 %v1022
        %v1111 = vpop.f32.mrb[0].mxu0
        %v1112 = vadd.f32 %v820, %v1111
        %v1113 = vpop.f32.mrb[0].mxu0
        %v1114 = vpop.f32.mrb[0].mxu0
        %v1115 = vadd.f32 %v823, %v1114
        %v1116 = vpop.f32.mrb[0].mxu0
        %1117 = vmatprep.mubr.bf16.mxu0 0
        %1118 = vmatmul.mubr.bf16.gmra.mrb[0].mxu0 %v1025
        %v1119 = vpop.f32.mrb[0].mxu0
        %v1120 = vadd.f32 %v828, %v1119
        %v1121 = vpop.f32.mrb[0].mxu0
        %v1122 = vpop.f32.mrb[0].mxu0
        %v1123 = vadd.f32 %v831, %v1122
        %v1124 = vpop.f32.mrb[0].mxu0
        %1125 = vmatprep.mubr.bf16.mxu0 0
        %1126 = vmatmul.mubr.bf16.gmra.mrb[0].mxu0 %v1028
        %v1127 = vpop.f32.mrb[0].mxu0
        %v1128 = vadd.f32 %v836, %v1127
        %v1129 = vpop.f32.mrb[0].mxu0
        %v1130 = vpop.f32.mrb[0].mxu0
        %v1131 = vadd.f32 %v839, %v1130
        %v1132 = vpop.f32.mrb[0].mxu0
        %1133 = vmatprep.mubr.bf16.mxu0 0
        %1134 = vmatmul.mubr.bf16.gmra.mrb[0].mxu0 %v1031
        %v1135 = vpop.f32.mrb[0].mxu0
        %v1136 = vadd.f32 %v844, %v1135
        %v1137 = vpop.f32.mrb[0].mxu0
        %v1138 = vpop.f32.mrb[0].mxu0
        %v1139 = vadd.f32 %v847, %v1138
        %v1140 = vpop.f32.mrb[0].mxu0
        %1141 = vmatprep.mubr.bf16.mxu0 0
        %1142 = vmatmul.mubr.bf16.gmra.mrb[0].mxu0 %v1034
        %v1143 = vpop.f32.mrb[0].mxu0
        %v1144 = vadd.f32 %v852, %v1143
        %v1145 = vpop.f32.mrb[0].mxu0
        %v1146 = vpop.f32.mrb[0].mxu0
        %v1147 = vadd.f32 %v855, %v1146
        %v1148 = vpop.f32.mrb[0].mxu0
        %1149 = vmatprep.mubr.bf16.mxu0 0
        %1150 = vmatmul.mubr.bf16.gmra.mrb[0].mxu0 %v1037
        %v1151 = vpop.f32.mrb[0].mxu0
        %v1152 = vadd.f32 %v860, %v1151
        %v1153 = vpop.f32.mrb[0].mxu0
        %v1154 = vpop.f32.mrb[0].mxu0
        %v1155 = vadd.f32 %v863, %v1154
        %v1156 = vpop.f32.mrb[0].mxu0
        %1157 = vmatprep.mubr.bf16.mxu0 0
        %1158 = vmatmul.mubr.bf16.gmra.mrb[0].mxu0 %v1040
        %v1159 = vpop.f32.mrb[0].mxu0
        %v1160 = vadd.f32 %v868, %v1159
        %v1161 = vpop.f32.mrb[0].mxu0
        %v1162 = vpop.f32.mrb[0].mxu0
        %v1163 = vadd.f32 %v871, %v1162
        %v1164 = vpop.f32.mrb[0].mxu0
        %1165 = vmatprep.mubr.bf16.mxu0 0
        %1166 = vmatmul.mubr.bf16.gmra.mrb[0].mxu0 %v1043
        %v1167 = vpop.f32.mrb[0].mxu0
        %v1168 = vadd.f32 %v876, %v1167
        %v1169 = vpop.f32.mrb[0].mxu0
        %v1170 = vpop.f32.mrb[0].mxu0
        %v1171 = vadd.f32 %v879, %v1170
        %v1172 = vpop.f32.mrb[0].mxu0
        %1173 = vmatprep.mubr.bf16.mxu0 0
        %1174 = vmatmul.mubr.bf16.gmra.mrb[0].mxu0 %v1046
        %v1175 = vpop.f32.mrb[0].mxu0
        %v1176 = vadd.f32 %v884, %v1175
        %v1177 = vpop.f32.mrb[0].mxu0
        %v1178 = vpop.f32.mrb[0].mxu0
        %v1179 = vadd.f32 %v887, %v1178
        %v1180 = vpop.f32.mrb[0].mxu0
        %1181 = vmatprep.mubr.bf16.mxu0 0
        %1182 = vmatmul.mubr.bf16.gmra.mrb[0].mxu0 %v1049
        %v1183 = vpop.f32.mrb[0].mxu0
        %v1184 = vadd.f32 %v892, %v1183
        %v1185 = vpop.f32.mrb[0].mxu0
        %v1186 = vpop.f32.mrb[0].mxu0
        %v1187 = vadd.f32 %v895, %v1186
        %v1188 = vpop.f32.mrb[0].mxu0
        %1189 = vmatprep.mubr.bf16.mxu0 0
        %1190 = vmatmul.mubr.bf16.gmra.mrb[0].mxu0 %v1052
        %v1191 = vpop.f32.mrb[0].mxu0
        %v1192 = vadd.f32 %v900, %v1191
        %v1193 = vpop.f32.mrb[0].mxu0
        %v1194 = vpop.f32.mrb[0].mxu0
        %v1195 = vadd.f32 %v903, %v1194
        %v1196 = vpop.f32.mrb[0].mxu0
        %1197 = vmatprep.mubr.bf16.mxu0 0
        %1198 = vmatmul.mubr.bf16.gmra.mrb[0].mxu0 %v1055
        %v1199 = vpop.f32.mrb[0].mxu0
        %v1200 = vadd.f32 %v908, %v1199
        %v1201 = vpop.f32.mrb[0].mxu0
        %v1202 = vpop.f32.mrb[0].mxu0
        %v1203 = vadd.f32 %v911, %v1202
        %v1204 = vpop.f32.mrb[0].mxu0
        %1205 = vmatprep.mubr.bf16.mxu0 0
        %1206 = vmatmul.mubr.bf16.gmra.mrb[0].mxu0 %v1058
        %v1207 = vpop.f32.mrb[0].mxu0
        %v1208 = vadd.f32 %v916, %v1207
        %v1209 = vpop.f32.mrb[0].mxu0
        %v1210 = vpop.f32.mrb[0].mxu0
        %v1211 = vadd.f32 %v919, %v1210
        %v1212 = vpop.f32.mrb[0].mxu0
        %1213 = vmatprep.mubr.bf16.mxu0 0
        %1214 = vmatmul.mubr.bf16.gmra.mrb[0].mxu0 %v1061
        %v1215 = vpop.f32.mrb[0].mxu0
        %v1216 = vadd.f32 %v924, %v1215
        %v1217 = vpop.f32.mrb[0].mxu0
        %v1218 = vpop.f32.mrb[0].mxu0
        %v1219 = vadd.f32 %v927, %v1218
        %v1220 = vpop.f32.mrb[0].mxu0
        %1221 = vmatprep.mubr.bf16.mxu0 0
        %1222 = vmatmul.mubr.bf16.gmra.mrb[0].mxu0 %v1064
        %v1223 = vpop.f32.mrb[0].mxu0
        %v1224 = vadd.f32 %v932, %v1223
        %v1225 = vpop.f32.mrb[0].mxu0
        %v1226 = vpop.f32.mrb[0].mxu0
        %v1227 = vadd.f32 %v935, %v1226
        %v1228 = vpop.f32.mrb[0].mxu0
        %1229 = vdwg.mxu0
        %vm1246 = vcmask 1042432
        %vm1247 = vcmask 1046532
        %vm1248 = vmor %vm1246, %vm1247
        %v1249 = vrot.slane %v232, 5
        %v1250 = vrot.slane %v1249, 4
        %v1251 = vrot.slane %v233, 5
        %v1252 = vsel %vm1248, %v1250, %v1251
        %v1253 = vrot.slane %v1251, 4
        %v1254 = vrot.slane %v234, 5
        %v1255 = vsel %vm1248, %v1253, %v1254
        %v1256 = vrot.slane %v235, 5
        %v1257 = vrot.slane %v1256, 4
        %v1258 = vrot.slane %v236, 5
        %v1259 = vsel %vm1248, %v1257, %v1258
        %v1260 = vrot.slane %v1258, 4
        %v1261 = vrot.slane %v237, 5
        %v1262 = vsel %vm1248, %v1260, %v1261
        %v1263 = vrot.slane %v238, 5
        %v1264 = vrot.slane %v1263, 4
        %v1265 = vrot.slane %v239, 5
        %v1266 = vsel %vm1248, %v1264, %v1265
        %v1267 = vrot.slane %v1265, 4
        %v1268 = vrot.slane %v240, 5
        %v1269 = vsel %vm1248, %v1267, %v1268
        %v1270 = vrot.slane %v241, 5
        %v1271 = vrot.slane %v1270, 4
        %v1272 = vrot.slane %v242, 5
        %v1273 = vsel %vm1248, %v1271, %v1272
        %v1274 = vrot.slane %v1272, 4
        %v1275 = vrot.slane %v243, 5
        %v1276 = vsel %vm1248, %v1274, %v1275
        %v1277 = vrot.slane %v244, 5
        %v1278 = vrot.slane %v1277, 4
        %v1279 = vrot.slane %v245, 5
        %v1280 = vsel %vm1248, %v1278, %v1279
        %v1281 = vrot.slane %v1279, 4
        %v1282 = vrot.slane %v246, 5
        %v1283 = vsel %vm1248, %v1281, %v1282
        %v1284 = vrot.slane %v247, 5
        %v1285 = vrot.slane %v1284, 4
        %v1286 = vrot.slane %v248, 5
        %v1287 = vsel %vm1248, %v1285, %v1286
        %v1288 = vrot.slane %v1286, 4
        %v1289 = vrot.slane %v249, 5
        %v1290 = vsel %vm1248, %v1288, %v1289
        %v1291 = vrot.slane %v250, 5
        %v1292 = vrot.slane %v1291, 4
        %v1293 = vrot.slane %v251, 5
        %v1294 = vsel %vm1248, %v1292, %v1293
        %v1295 = vrot.slane %v1293, 4
        %v1296 = vrot.slane %v252, 5
        %v1297 = vsel %vm1248, %v1295, %v1296
        %v1298 = vrot.slane %v253, 5
        %v1299 = vrot.slane %v1298, 4
        %v1300 = vrot.slane %v254, 5
        %v1301 = vsel %vm1248, %v1299, %v1300
        %v1302 = vrot.slane %v1300, 4
        %v1303 = vrot.slane %v255, 5
        %v1304 = vsel %vm1248, %v1302, %v1303
        %v1305 = vrot.slane %v256, 5
        %v1306 = vrot.slane %v1305, 4
        %v1307 = vrot.slane %v257, 5
        %v1308 = vsel %vm1248, %v1306, %v1307
        %v1309 = vrot.slane %v1307, 4
        %v1310 = vrot.slane %v258, 5
        %v1311 = vsel %vm1248, %v1309, %v1310
        %v1312 = vrot.slane %v259, 5
        %v1313 = vrot.slane %v1312, 4
        %v1314 = vrot.slane %v260, 5
        %v1315 = vsel %vm1248, %v1313, %v1314
        %v1316 = vrot.slane %v1314, 4
        %v1317 = vrot.slane %v261, 5
        %v1318 = vsel %vm1248, %v1316, %v1317
        %v1319 = vrot.slane %v262, 5
        %v1320 = vrot.slane %v1319, 4
        %v1321 = vrot.slane %v263, 5
        %v1322 = vsel %vm1248, %v1320, %v1321
        %v1323 = vrot.slane %v1321, 4
        %v1324 = vrot.slane %v264, 5
        %v1325 = vsel %vm1248, %v1323, %v1324
        %v1326 = vrot.slane %v265, 5
        %v1327 = vrot.slane %v1326, 4
        %v1328 = vrot.slane %v266, 5
        %v1329 = vsel %vm1248, %v1327, %v1328
        %v1330 = vrot.slane %v1328, 4
        %v1331 = vrot.slane %v267, 5
        %v1332 = vsel %vm1248, %v1330, %v1331
        %v1333 = vrot.slane %v268, 5
        %v1334 = vrot.slane %v1333, 4
        %v1335 = vrot.slane %v269, 5
        %v1336 = vsel %vm1248, %v1334, %v1335
        %v1337 = vrot.slane %v1335, 4
        %v1338 = vrot.slane %v270, 5
        %v1339 = vsel %vm1248, %v1337, %v1338
        %v1340 = vrot.slane %v271, 5
        %v1341 = vrot.slane %v1340, 4
        %v1342 = vrot.slane %v272, 5
        %v1343 = vsel %vm1248, %v1341, %v1342
        %v1344 = vrot.slane %v1342, 4
        %v1345 = vrot.slane %v273, 5
        %v1346 = vsel %vm1248, %v1344, %v1345
        %v1347 = vrot.slane %v274, 5
        %v1348 = vrot.slane %v1347, 4
        %v1349 = vrot.slane %v275, 5
        %v1350 = vsel %vm1248, %v1348, %v1349
        %v1351 = vrot.slane %v1349, 4
        %v1352 = vrot.slane %v276, 5
        %v1353 = vsel %vm1248, %v1351, %v1352
        %v1354 = vrot.slane %v277, 5
        %v1355 = vrot.slane %v1354, 4
        %v1356 = vrot.slane %v278, 5
        %v1357 = vsel %vm1248, %v1355, %v1356
        %v1358 = vrot.slane %v1356, 4
        %v1359 = vrot.slane %v279, 5
        %v1360 = vsel %vm1248, %v1358, %v1359
        %s1361 = scalar_lea.vmem %s227, 4
        %v1362 = vld [vmem:[%s1361] sm:$0x3]
        %v1363 = vunpack.c.l.b16 %v1252
        %v1364 = vunpack.c.l.b16 %v1255
        %v1365 = vunpack.c.l.b16 %v1259
        %v1366 = vunpack.c.l.b16 %v1262
        %v1367 = vunpack.c.l.b16 %v1266
        %v1368 = vunpack.c.l.b16 %v1269
        %v1369 = vunpack.c.l.b16 %v1273
        %v1370 = vunpack.c.l.b16 %v1276
        %v1371 = vunpack.c.l.b16 %v1280
        %v1372 = vunpack.c.l.b16 %v1283
        %v1373 = vunpack.c.l.b16 %v1287
        %v1374 = vunpack.c.l.b16 %v1290
        %v1375 = vunpack.c.l.b16 %v1294
        %v1376 = vunpack.c.l.b16 %v1297
        %v1377 = vunpack.c.l.b16 %v1301
        %v1378 = vunpack.c.l.b16 %v1304
        %v1379 = vunpack.c.l.b16 %v1308
        %v1380 = vunpack.c.l.b16 %v1311
        %v1381 = vunpack.c.l.b16 %v1315
        %v1382 = vunpack.c.l.b16 %v1318
        %v1383 = vunpack.c.l.b16 %v1322
        %v1384 = vunpack.c.l.b16 %v1325
        %v1385 = vunpack.c.l.b16 %v1329
        %v1386 = vunpack.c.l.b16 %v1332
        %v1387 = vunpack.c.l.b16 %v1336
        %v1388 = vunpack.c.l.b16 %v1339
        %v1389 = vunpack.c.l.b16 %v1343
        %v1390 = vunpack.c.l.b16 %v1346
        %v1391 = vunpack.c.l.b16 %v1350
        %v1392 = vunpack.c.l.b16 %v1353
        %v1393 = vunpack.c.l.b16 %v1357
        %v1394 = vunpack.c.l.b16 %v1360
        %v1395 = vpack.c.b16 %v1364, %v1363
        %v1396 = vpack.c.b16 %v1366, %v1365
        %v1397 = vpack.c.b16 %v1368, %v1367
        %v1398 = vpack.c.b16 %v1370, %v1369
        %v1399 = vpack.c.b16 %v1372, %v1371
        %v1400 = vpack.c.b16 %v1374, %v1373
        %v1401 = vpack.c.b16 %v1376, %v1375
        %v1402 = vpack.c.b16 %v1378, %v1377
        %v1403 = vpack.c.b16 %v1380, %v1379
        %v1404 = vpack.c.b16 %v1382, %v1381
        %v1405 = vpack.c.b16 %v1384, %v1383
        %v1406 = vpack.c.b16 %v1386, %v1385
        %v1407 = vpack.c.b16 %v1388, %v1387
        %v1408 = vpack.c.b16 %v1390, %v1389
        %v1409 = vpack.c.b16 %v1392, %v1391
        %v1410 = vpack.c.b16 %v1394, %v1393
        %v1412 = vsel %vm724, %v1395, 0
        %v1415 = vsel %vm724, %v1396, 0
        %v1418 = vsel %vm724, %v1397, 0
        %v1421 = vsel %vm724, %v1398, 0
        %v1424 = vsel %vm724, %v1399, 0
        %v1427 = vsel %vm724, %v1400, 0
        %v1430 = vsel %vm724, %v1401, 0
        %v1433 = vsel %vm724, %v1402, 0
        %v1436 = vsel %vm724, %v1403, 0
        %v1439 = vsel %vm724, %v1404, 0
        %v1442 = vsel %vm724, %v1405, 0
        %v1445 = vsel %vm724, %v1406, 0
        %v1448 = vsel %vm724, %v1407, 0
        %v1451 = vsel %vm724, %v1408, 0
        %v1454 = vsel %vm724, %v1409, 0
        %v1457 = vsel %vm724, %v1410, 0
        %v1460 = vsel %vm773, %v1362, 0
        %1462 = vmatprep.subr.bf16.mxu0 0
        %1463 = vmatpush1.bf16.msra.mxu0 %v1460
        %1464 = vmatprep.subr.bf16.mxu0 0
        %1465 = vmatpush1.bf16.msra.mxu0 0
        %1466 = vmatprep.subr.bf16.mxu0 0
        %1467 = vmatpush1.bf16.msra.mxu0 0
        %1468 = vmatprep.subr.bf16.mxu0 0
        %1469 = vmatpush1.bf16.msra.mxu0 0
        %1470 = vmatprep.subr.bf16.mxu0 0
        %1471 = vmatpush1.bf16.msra.mxu0 0
        %1472 = vmatprep.subr.bf16.mxu0 0
        %1473 = vmatpush1.bf16.msra.mxu0 0
        %1474 = vmatprep.subr.bf16.mxu0 0
        %1475 = vmatpush1.bf16.msra.mxu0 0
        %1476 = vmatprep.subr.bf16.mxu0 0
        %1477 = vmatpush1.bf16.msra.mxu0 0
        %1478 = vmatprep.subr.bf16.mxu0 0
        %1479 = vmatpush1.bf16.msra.mxu0 0
        %1480 = vmatprep.subr.bf16.mxu0 0
        %1481 = vmatpush1.bf16.msra.mxu0 0
        %1482 = vmatprep.subr.bf16.mxu0 0
        %1483 = vmatpush1.bf16.msra.mxu0 0
        %1484 = vmatprep.subr.bf16.mxu0 0
        %1485 = vmatpush1.bf16.msra.mxu0 0
        %1486 = vmatprep.subr.bf16.mxu0 0
        %1487 = vmatpush1.bf16.msra.mxu0 0
        %1488 = vmatprep.subr.bf16.mxu0 0
        %1489 = vmatpush1.bf16.msra.mxu0 0
        %1490 = vmatprep.subr.bf16.mxu0 0
        %1491 = vmatpush1.bf16.msra.mxu0 0
        %1492 = vmatprep.subr.bf16.mxu0 0
        %1493 = vmatpush1.bf16.msra.mxu0 0
        %1494 = vmatprep.mubr.bf16.mxu0 0
        %1495 = vmatmul.mubr.bf16.gmra.mrb[0].mxu0 %v1412
        %v1496 = vpop.f32.mrb[0].mxu0
        %v1497 = vadd.f32 0.0, %v1496
        %v1498 = vpop.f32.mrb[0].mxu0
        %v1499 = vpop.f32.mrb[0].mxu0
        %v1500 = vadd.f32 0.0, %v1499
        %v1501 = vpop.f32.mrb[0].mxu0
        %1502 = vmatprep.mubr.bf16.mxu0 0
        %1503 = vmatmul.mubr.bf16.gmra.mrb[0].mxu0 %v1415
        %v1504 = vpop.f32.mrb[0].mxu0
        %v1505 = vadd.f32 0.0, %v1504
        %v1506 = vpop.f32.mrb[0].mxu0
        %v1507 = vpop.f32.mrb[0].mxu0
        %v1508 = vadd.f32 0.0, %v1507
        %v1509 = vpop.f32.mrb[0].mxu0
        %1510 = vmatprep.mubr.bf16.mxu0 0
        %1511 = vmatmul.mubr.bf16.gmra.mrb[0].mxu0 %v1418
        %v1512 = vpop.f32.mrb[0].mxu0
        %v1513 = vadd.f32 0.0, %v1512
        %v1514 = vpop.f32.mrb[0].mxu0
        %v1515 = vpop.f32.mrb[0].mxu0
        %v1516 = vadd.f32 0.0, %v1515
        %v1517 = vpop.f32.mrb[0].mxu0
        %1518 = vmatprep.mubr.bf16.mxu0 0
        %1519 = vmatmul.mubr.bf16.gmra.mrb[0].mxu0 %v1421
        %v1520 = vpop.f32.mrb[0].mxu0
        %v1521 = vadd.f32 0.0, %v1520
        %v1522 = vpop.f32.mrb[0].mxu0
        %v1523 = vpop.f32.mrb[0].mxu0
        %v1524 = vadd.f32 0.0, %v1523
        %v1525 = vpop.f32.mrb[0].mxu0
        %1526 = vmatprep.mubr.bf16.mxu0 0
        %1527 = vmatmul.mubr.bf16.gmra.mrb[0].mxu0 %v1424
        %v1528 = vpop.f32.mrb[0].mxu0
        %v1529 = vadd.f32 0.0, %v1528
        %v1530 = vpop.f32.mrb[0].mxu0
        %v1531 = vpop.f32.mrb[0].mxu0
        %v1532 = vadd.f32 0.0, %v1531
        %v1533 = vpop.f32.mrb[0].mxu0
        %1534 = vmatprep.mubr.bf16.mxu0 0
        %1535 = vmatmul.mubr.bf16.gmra.mrb[0].mxu0 %v1427
        %v1536 = vpop.f32.mrb[0].mxu0
        %v1537 = vadd.f32 0.0, %v1536
        %v1538 = vpop.f32.mrb[0].mxu0
        %v1539 = vpop.f32.mrb[0].mxu0
        %v1540 = vadd.f32 0.0, %v1539
        %v1541 = vpop.f32.mrb[0].mxu0
        %1542 = vmatprep.mubr.bf16.mxu0 0
        %1543 = vmatmul.mubr.bf16.gmra.mrb[0].mxu0 %v1430
        %v1544 = vpop.f32.mrb[0].mxu0
        %v1545 = vadd.f32 0.0, %v1544
        %v1546 = vpop.f32.mrb[0].mxu0
        %v1547 = vpop.f32.mrb[0].mxu0
        %v1548 = vadd.f32 0.0, %v1547
        %v1549 = vpop.f32.mrb[0].mxu0
        %1550 = vmatprep.mubr.bf16.mxu0 0
        %1551 = vmatmul.mubr.bf16.gmra.mrb[0].mxu0 %v1433
        %v1552 = vpop.f32.mrb[0].mxu0
        %v1553 = vadd.f32 0.0, %v1552
        %v1554 = vpop.f32.mrb[0].mxu0
        %v1555 = vpop.f32.mrb[0].mxu0
        %v1556 = vadd.f32 0.0, %v1555
        %v1557 = vpop.f32.mrb[0].mxu0
        %1558 = vmatprep.mubr.bf16.mxu0 0
        %1559 = vmatmul.mubr.bf16.gmra.mrb[0].mxu0 %v1436
        %v1560 = vpop.f32.mrb[0].mxu0
        %v1561 = vadd.f32 0.0, %v1560
        %v1562 = vpop.f32.mrb[0].mxu0
        %v1563 = vpop.f32.mrb[0].mxu0
        %v1564 = vadd.f32 0.0, %v1563
        %v1565 = vpop.f32.mrb[0].mxu0
        %1566 = vmatprep.mubr.bf16.mxu0 0
        %1567 = vmatmul.mubr.bf16.gmra.mrb[0].mxu0 %v1439
        %v1568 = vpop.f32.mrb[0].mxu0
        %v1569 = vadd.f32 0.0, %v1568
        %v1570 = vpop.f32.mrb[0].mxu0
        %v1571 = vpop.f32.mrb[0].mxu0
        %v1572 = vadd.f32 0.0, %v1571
        %v1573 = vpop.f32.mrb[0].mxu0
        %1574 = vmatprep.mubr.bf16.mxu0 0
        %1575 = vmatmul.mubr.bf16.gmra.mrb[0].mxu0 %v1442
        %v1576 = vpop.f32.mrb[0].mxu0
        %v1577 = vadd.f32 0.0, %v1576
        %v1578 = vpop.f32.mrb[0].mxu0
        %v1579 = vpop.f32.mrb[0].mxu0
        %v1580 = vadd.f32 0.0, %v1579
        %v1581 = vpop.f32.mrb[0].mxu0
        %1582 = vmatprep.mubr.bf16.mxu0 0
        %1583 = vmatmul.mubr.bf16.gmra.mrb[0].mxu0 %v1445
        %v1584 = vpop.f32.mrb[0].mxu0
        %v1585 = vadd.f32 0.0, %v1584
        %v1586 = vpop.f32.mrb[0].mxu0
        %v1587 = vpop.f32.mrb[0].mxu0
        %v1588 = vadd.f32 0.0, %v1587
        %v1589 = vpop.f32.mrb[0].mxu0
        %1590 = vmatprep.mubr.bf16.mxu0 0
        %1591 = vmatmul.mubr.bf16.gmra.mrb[0].mxu0 %v1448
        %v1592 = vpop.f32.mrb[0].mxu0
        %v1593 = vadd.f32 0.0, %v1592
        %v1594 = vpop.f32.mrb[0].mxu0
        %v1595 = vpop.f32.mrb[0].mxu0
        %v1596 = vadd.f32 0.0, %v1595
        %v1597 = vpop.f32.mrb[0].mxu0
        %1598 = vmatprep.mubr.bf16.mxu0 0
        %1599 = vmatmul.mubr.bf16.gmra.mrb[0].mxu0 %v1451
        %v1600 = vpop.f32.mrb[0].mxu0
        %v1601 = vadd.f32 0.0, %v1600
        %v1602 = vpop.f32.mrb[0].mxu0
        %v1603 = vpop.f32.mrb[0].mxu0
        %v1604 = vadd.f32 0.0, %v1603
        %v1605 = vpop.f32.mrb[0].mxu0
        %1606 = vmatprep.mubr.bf16.mxu0 0
        %1607 = vmatmul.mubr.bf16.gmra.mrb[0].mxu0 %v1454
        %v1608 = vpop.f32.mrb[0].mxu0
        %v1609 = vadd.f32 0.0, %v1608
        %v1610 = vpop.f32.mrb[0].mxu0
        %v1611 = vpop.f32.mrb[0].mxu0
        %v1612 = vadd.f32 0.0, %v1611
        %v1613 = vpop.f32.mrb[0].mxu0
        %1614 = vmatprep.mubr.bf16.mxu0 0
        %1615 = vmatmul.mubr.bf16.gmra.mrb[0].mxu0 %v1457
        %v1616 = vpop.f32.mrb[0].mxu0
        %v1617 = vadd.f32 0.0, %v1616
        %v1618 = vpop.f32.mrb[0].mxu0
        %v1619 = vpop.f32.mrb[0].mxu0
        %v1620 = vadd.f32 0.0, %v1619
        %v1621 = vpop.f32.mrb[0].mxu0
        %1622 = vdwg.mxu0
        %v1623 = vadd.f32 %v1104, %v1497
        %v1624 = vadd.f32 %v1107, %v1500
        %v1625 = vadd.f32 %v1112, %v1505
        %v1626 = vadd.f32 %v1115, %v1508
        %v1627 = vadd.f32 %v1120, %v1513
        %v1628 = vadd.f32 %v1123, %v1516
        %v1629 = vadd.f32 %v1128, %v1521
        %v1630 = vadd.f32 %v1131, %v1524
        %v1631 = vadd.f32 %v1136, %v1529
        %v1632 = vadd.f32 %v1139, %v1532
        %v1633 = vadd.f32 %v1144, %v1537
        %v1634 = vadd.f32 %v1147, %v1540
        %v1635 = vadd.f32 %v1152, %v1545
        %v1636 = vadd.f32 %v1155, %v1548
        %v1637 = vadd.f32 %v1160, %v1553
        %v1638 = vadd.f32 %v1163, %v1556
        %v1639 = vadd.f32 %v1168, %v1561
        %v1640 = vadd.f32 %v1171, %v1564
        %v1641 = vadd.f32 %v1176, %v1569
        %v1642 = vadd.f32 %v1179, %v1572
        %v1643 = vadd.f32 %v1184, %v1577
        %v1644 = vadd.f32 %v1187, %v1580
        %v1645 = vadd.f32 %v1192, %v1585
        %v1646 = vadd.f32 %v1195, %v1588
        %v1647 = vadd.f32 %v1200, %v1593
        %v1648 = vadd.f32 %v1203, %v1596
        %v1649 = vadd.f32 %v1208, %v1601
        %v1650 = vadd.f32 %v1211, %v1604
        %v1651 = vadd.f32 %v1216, %v1609
        %v1652 = vadd.f32 %v1219, %v1612
        %v1653 = vadd.f32 %v1224, %v1617
        %v1654 = vadd.f32 %v1227, %v1620
        %s1655 = scalar_lea.vmem %s227, 6
        %v1656 = vld [vmem:[%s1655] sm:$0x3]
        %v1659 = vunpack.c.l.b16 %v280
        %v1660 = vunpack.c.l.b16 %v281
        %v1661 = vpack.c.b16 %v1660, %v1659
        %v1663 = vsel %vm724, %v1661, 0
        %v1666 = vsel %vm773, %v1656, 0
        %1668 = vmatprep.subr.bf16.mxu0 0
        %1669 = vmatpush1.bf16.msra.mxu0 %v1666
        %1670 = vmatprep.subr.bf16.mxu0 0
        %1671 = vmatpush1.bf16.msra.mxu0 0
        %1672 = vmatprep.subr.bf16.mxu0 0
        %1673 = vmatpush1.bf16.msra.mxu0 0
        %1674 = vmatprep.subr.bf16.mxu0 0
        %1675 = vmatpush1.bf16.msra.mxu0 0
        %1676 = vmatprep.subr.bf16.mxu0 0
        %1677 = vmatpush1.bf16.msra.mxu0 0
        %1678 = vmatprep.subr.bf16.mxu0 0
        %1679 = vmatpush1.bf16.msra.mxu0 0
        %1680 = vmatprep.subr.bf16.mxu0 0
        %1681 = vmatpush1.bf16.msra.mxu0 0
        %1682 = vmatprep.subr.bf16.mxu0 0
        %1683 = vmatpush1.bf16.msra.mxu0 0
        %1684 = vmatprep.subr.bf16.mxu0 0
        %1685 = vmatpush1.bf16.msra.mxu0 0
        %1686 = vmatprep.subr.bf16.mxu0 0
        %1687 = vmatpush1.bf16.msra.mxu0 0
        %1688 = vmatprep.subr.bf16.mxu0 0
        %1689 = vmatpush1.bf16.msra.mxu0 0
        %1690 = vmatprep.subr.bf16.mxu0 0
        %1691 = vmatpush1.bf16.msra.mxu0 0
        %1692 = vmatprep.subr.bf16.mxu0 0
        %1693 = vmatpush1.bf16.msra.mxu0 0
        %1694 = vmatprep.subr.bf16.mxu0 0
        %1695 = vmatpush1.bf16.msra.mxu0 0
        %1696 = vmatprep.subr.bf16.mxu0 0
        %1697 = vmatpush1.bf16.msra.mxu0 0
        %1698 = vmatprep.subr.bf16.mxu0 0
        %1699 = vmatpush1.bf16.msra.mxu0 0
        %1700 = vmatprep.mubr.bf16.mxu0 0
        %1701 = vmatmul.mubr.bf16.gmra.mrb[0].mxu0 %v1022
        %v1702 = vpop.f32.mrb[0].mxu0
        %v1703 = vadd.f32 0.0, %v1702
        %v1704 = vpop.f32.mrb[0].mxu0
        %v1705 = vpop.f32.mrb[0].mxu0
        %v1706 = vadd.f32 0.0, %v1705
        %v1707 = vpop.f32.mrb[0].mxu0
        %1708 = vmatprep.mubr.bf16.mxu0 0
        %1709 = vmatmul.mubr.bf16.gmra.mrb[0].mxu0 %v1025
        %v1710 = vpop.f32.mrb[0].mxu0
        %v1711 = vadd.f32 0.0, %v1710
        %v1712 = vpop.f32.mrb[0].mxu0
        %v1713 = vpop.f32.mrb[0].mxu0
        %v1714 = vadd.f32 0.0, %v1713
        %v1715 = vpop.f32.mrb[0].mxu0
        %1716 = vmatprep.mubr.bf16.mxu0 0
        %1717 = vmatmul.mubr.bf16.gmra.mrb[0].mxu0 %v1028
        %v1718 = vpop.f32.mrb[0].mxu0
        %v1719 = vadd.f32 0.0, %v1718
        %v1720 = vpop.f32.mrb[0].mxu0
        %v1721 = vpop.f32.mrb[0].mxu0
        %v1722 = vadd.f32 0.0, %v1721
        %v1723 = vpop.f32.mrb[0].mxu0
        %1724 = vmatprep.mubr.bf16.mxu0 0
        %1725 = vmatmul.mubr.bf16.gmra.mrb[0].mxu0 %v1031
        %v1726 = vpop.f32.mrb[0].mxu0
        %v1727 = vadd.f32 0.0, %v1726
        %v1728 = vpop.f32.mrb[0].mxu0
        %v1729 = vpop.f32.mrb[0].mxu0
        %v1730 = vadd.f32 0.0, %v1729
        %v1731 = vpop.f32.mrb[0].mxu0
        %1732 = vmatprep.mubr.bf16.mxu0 0
        %1733 = vmatmul.mubr.bf16.gmra.mrb[0].mxu0 %v1034
        %v1734 = vpop.f32.mrb[0].mxu0
        %v1735 = vadd.f32 0.0, %v1734
        %v1736 = vpop.f32.mrb[0].mxu0
        %v1737 = vpop.f32.mrb[0].mxu0
        %v1738 = vadd.f32 0.0, %v1737
        %v1739 = vpop.f32.mrb[0].mxu0
        %1740 = vmatprep.mubr.bf16.mxu0 0
        %1741 = vmatmul.mubr.bf16.gmra.mrb[0].mxu0 %v1037
        %v1742 = vpop.f32.mrb[0].mxu0
        %v1743 = vadd.f32 0.0, %v1742
        %v1744 = vpop.f32.mrb[0].mxu0
        %v1745 = vpop.f32.mrb[0].mxu0
        %v1746 = vadd.f32 0.0, %v1745
        %v1747 = vpop.f32.mrb[0].mxu0
        %1748 = vmatprep.mubr.bf16.mxu0 0
        %1749 = vmatmul.mubr.bf16.gmra.mrb[0].mxu0 %v1040
        %v1750 = vpop.f32.mrb[0].mxu0
        %v1751 = vadd.f32 0.0, %v1750
        %v1752 = vpop.f32.mrb[0].mxu0
        %v1753 = vpop.f32.mrb[0].mxu0
        %v1754 = vadd.f32 0.0, %v1753
        %v1755 = vpop.f32.mrb[0].mxu0
        %1756 = vmatprep.mubr.bf16.mxu0 0
        %1757 = vmatmul.mubr.bf16.gmra.mrb[0].mxu0 %v1043
        %v1758 = vpop.f32.mrb[0].mxu0
        %v1759 = vadd.f32 0.0, %v1758
        %v1760 = vpop.f32.mrb[0].mxu0
        %v1761 = vpop.f32.mrb[0].mxu0
        %v1762 = vadd.f32 0.0, %v1761
        %v1763 = vpop.f32.mrb[0].mxu0
        %1764 = vmatprep.mubr.bf16.mxu0 0
        %1765 = vmatmul.mubr.bf16.gmra.mrb[0].mxu0 %v1046
        %v1766 = vpop.f32.mrb[0].mxu0
        %v1767 = vadd.f32 0.0, %v1766
        %v1768 = vpop.f32.mrb[0].mxu0
        %v1769 = vpop.f32.mrb[0].mxu0
        %v1770 = vadd.f32 0.0, %v1769
        %v1771 = vpop.f32.mrb[0].mxu0
        %1772 = vmatprep.mubr.bf16.mxu0 0
        %1773 = vmatmul.mubr.bf16.gmra.mrb[0].mxu0 %v1049
        %v1774 = vpop.f32.mrb[0].mxu0
        %v1775 = vadd.f32 0.0, %v1774
        %v1776 = vpop.f32.mrb[0].mxu0
        %v1777 = vpop.f32.mrb[0].mxu0
        %v1778 = vadd.f32 0.0, %v1777
        %v1779 = vpop.f32.mrb[0].mxu0
        %1780 = vmatprep.mubr.bf16.mxu0 0
        %1781 = vmatmul.mubr.bf16.gmra.mrb[0].mxu0 %v1052
        %v1782 = vpop.f32.mrb[0].mxu0
        %v1783 = vadd.f32 0.0, %v1782
        %v1784 = vpop.f32.mrb[0].mxu0
        %v1785 = vpop.f32.mrb[0].mxu0
        %v1786 = vadd.f32 0.0, %v1785
        %v1787 = vpop.f32.mrb[0].mxu0
        %1788 = vmatprep.mubr.bf16.mxu0 0
        %1789 = vmatmul.mubr.bf16.gmra.mrb[0].mxu0 %v1055
        %v1790 = vpop.f32.mrb[0].mxu0
        %v1791 = vadd.f32 0.0, %v1790
        %v1792 = vpop.f32.mrb[0].mxu0
        %v1793 = vpop.f32.mrb[0].mxu0
        %v1794 = vadd.f32 0.0, %v1793
        %v1795 = vpop.f32.mrb[0].mxu0
        %1796 = vmatprep.mubr.bf16.mxu0 0
        %1797 = vmatmul.mubr.bf16.gmra.mrb[0].mxu0 %v1058
        %v1798 = vpop.f32.mrb[0].mxu0
        %v1799 = vadd.f32 0.0, %v1798
        %v1800 = vpop.f32.mrb[0].mxu0
        %v1801 = vpop.f32.mrb[0].mxu0
        %v1802 = vadd.f32 0.0, %v1801
        %v1803 = vpop.f32.mrb[0].mxu0
        %1804 = vmatprep.mubr.bf16.mxu0 0
        %1805 = vmatmul.mubr.bf16.gmra.mrb[0].mxu0 %v1061
        %v1806 = vpop.f32.mrb[0].mxu0
        %v1807 = vadd.f32 0.0, %v1806
        %v1808 = vpop.f32.mrb[0].mxu0
        %v1809 = vpop.f32.mrb[0].mxu0
        %v1810 = vadd.f32 0.0, %v1809
        %v1811 = vpop.f32.mrb[0].mxu0
        %1812 = vmatprep.mubr.bf16.mxu0 0
        %1813 = vmatmul.mubr.bf16.gmra.mrb[0].mxu0 %v1064
        %v1814 = vpop.f32.mrb[0].mxu0
        %v1815 = vadd.f32 0.0, %v1814
        %v1816 = vpop.f32.mrb[0].mxu0
        %v1817 = vpop.f32.mrb[0].mxu0
        %v1818 = vadd.f32 0.0, %v1817
        %v1819 = vpop.f32.mrb[0].mxu0
        %1820 = vmatprep.mubr.bf16.mxu0 0
        %1821 = vmatmul.mubr.bf16.gmra.mrb[0].mxu0 %v1663
        %v1822 = vpop.f32.mrb[0].mxu0
        %v1823 = vadd.f32 0.0, %v1822
        %v1824 = vpop.f32.mrb[0].mxu0
        %v1825 = vpop.f32.mrb[0].mxu0
        %v1826 = vadd.f32 0.0, %v1825
        %v1827 = vpop.f32.mrb[0].mxu0
        %1828 = vdwg.mxu0
        %v1829 = vadd.f32 %v1623, %v1703
        %v1830 = vadd.f32 %v1624, %v1706
        %v1831 = vadd.f32 %v1625, %v1711
        %v1832 = vadd.f32 %v1626, %v1714
        %v1833 = vadd.f32 %v1627, %v1719
        %v1834 = vadd.f32 %v1628, %v1722
        %v1835 = vadd.f32 %v1629, %v1727
        %v1836 = vadd.f32 %v1630, %v1730
        %v1837 = vadd.f32 %v1631, %v1735
        %v1838 = vadd.f32 %v1632, %v1738
        %v1839 = vadd.f32 %v1633, %v1743
        %v1840 = vadd.f32 %v1634, %v1746
        %v1841 = vadd.f32 %v1635, %v1751
        %v1842 = vadd.f32 %v1636, %v1754
        %v1843 = vadd.f32 %v1637, %v1759
        %v1844 = vadd.f32 %v1638, %v1762
        %v1845 = vadd.f32 %v1639, %v1767
        %v1846 = vadd.f32 %v1640, %v1770
        %v1847 = vadd.f32 %v1641, %v1775
        %v1848 = vadd.f32 %v1642, %v1778
        %v1849 = vadd.f32 %v1643, %v1783
        %v1850 = vadd.f32 %v1644, %v1786
        %v1851 = vadd.f32 %v1645, %v1791
        %v1852 = vadd.f32 %v1646, %v1794
        %v1853 = vadd.f32 %v1647, %v1799
        %v1854 = vadd.f32 %v1648, %v1802
        %v1855 = vadd.f32 %v1649, %v1807
        %v1856 = vadd.f32 %v1650, %v1810
        %v1857 = vadd.f32 %v1651, %v1815
        %v1858 = vadd.f32 %v1652, %v1818
        %v1859 = vadd.f32 %v1653, %v1823
        %v1860 = vadd.f32 %v1654, %v1826
        %v1862 = vshrl.u32 %v280, 16
        %v1864 = vrot.slane %v1862, 4
        %v1865 = vshll.u32 %v280, 16
        %v1867 = vrot.slane %v1865, 5
        %v1868 = vor.u32 %v1864, %v1867
        %v1869 = vrot.slane %v1868, 4
        %v1871 = vshll.u32 %v281, 16
        %v1873 = vrot.slane %v1871, 5
        %v1874 = vsel %vm289, %v1869, %v1873
        %v1875 = vshrl.u32 %v281, 16
        %v1877 = vrot.slane %v1875, 4
        %v1878 = vor.u32 %v1877, %v1873
        %v1879 = vrot.slane %v1878, 4
        %v1881 = vshll.u32 %v282, 16
        %v1883 = vrot.slane %v1881, 5
        %v1884 = vsel %vm289, %v1879, %v1883
        %s1885 = scalar_lea.vmem %s227, 8
        %v1886 = vld [vmem:[%s1885] sm:$0x3]
        %v1887 = vunpack.c.l.b16 %v1874
        %v1888 = vunpack.c.l.b16 %v1884
        %v1889 = vpack.c.b16 %v1888, %v1887
        %v1891 = vsel %vm724, %v1889, 0
        %v1894 = vsel %vm773, %v1886, 0
        %1896 = vmatprep.subr.bf16.mxu0 0
        %1897 = vmatpush1.bf16.msra.mxu0 %v1894
        %1898 = vmatprep.subr.bf16.mxu0 0
        %1899 = vmatpush1.bf16.msra.mxu0 0
        %1900 = vmatprep.subr.bf16.mxu0 0
        %1901 = vmatpush1.bf16.msra.mxu0 0
        %1902 = vmatprep.subr.bf16.mxu0 0
        %1903 = vmatpush1.bf16.msra.mxu0 0
        %1904 = vmatprep.subr.bf16.mxu0 0
        %1905 = vmatpush1.bf16.msra.mxu0 0
        %1906 = vmatprep.subr.bf16.mxu0 0
        %1907 = vmatpush1.bf16.msra.mxu0 0
        %1908 = vmatprep.subr.bf16.mxu0 0
        %1909 = vmatpush1.bf16.msra.mxu0 0
        %1910 = vmatprep.subr.bf16.mxu0 0
        %1911 = vmatpush1.bf16.msra.mxu0 0
        %1912 = vmatprep.subr.bf16.mxu0 0
        %1913 = vmatpush1.bf16.msra.mxu0 0
        %1914 = vmatprep.subr.bf16.mxu0 0
        %1915 = vmatpush1.bf16.msra.mxu0 0
        %1916 = vmatprep.subr.bf16.mxu0 0
        %1917 = vmatpush1.bf16.msra.mxu0 0
        %1918 = vmatprep.subr.bf16.mxu0 0
        %1919 = vmatpush1.bf16.msra.mxu0 0
        %1920 = vmatprep.subr.bf16.mxu0 0
        %1921 = vmatpush1.bf16.msra.mxu0 0
        %1922 = vmatprep.subr.bf16.mxu0 0
        %1923 = vmatpush1.bf16.msra.mxu0 0
        %1924 = vmatprep.subr.bf16.mxu0 0
        %1925 = vmatpush1.bf16.msra.mxu0 0
        %1926 = vmatprep.subr.bf16.mxu0 0
        %1927 = vmatpush1.bf16.msra.mxu0 0
        %1928 = vmatprep.mubr.bf16.mxu0 0
        %1929 = vmatmul.mubr.bf16.gmra.mrb[0].mxu0 %v729
        %v1930 = vpop.f32.mrb[0].mxu0
        %v1931 = vadd.f32 0.0, %v1930
        %v1932 = vpop.f32.mrb[0].mxu0
        %v1933 = vpop.f32.mrb[0].mxu0
        %v1934 = vadd.f32 0.0, %v1933
        %v1935 = vpop.f32.mrb[0].mxu0
        %1936 = vmatprep.mubr.bf16.mxu0 0
        %1937 = vmatmul.mubr.bf16.gmra.mrb[0].mxu0 %v732
        %v1938 = vpop.f32.mrb[0].mxu0
        %v1939 = vadd.f32 0.0, %v1938
        %v1940 = vpop.f32.mrb[0].mxu0
        %v1941 = vpop.f32.mrb[0].mxu0
        %v1942 = vadd.f32 0.0, %v1941
        %v1943 = vpop.f32.mrb[0].mxu0
        %1944 = vmatprep.mubr.bf16.mxu0 0
        %1945 = vmatmul.mubr.bf16.gmra.mrb[0].mxu0 %v735
        %v1946 = vpop.f32.mrb[0].mxu0
        %v1947 = vadd.f32 0.0, %v1946
        %v1948 = vpop.f32.mrb[0].mxu0
        %v1949 = vpop.f32.mrb[0].mxu0
        %v1950 = vadd.f32 0.0, %v1949
        %v1951 = vpop.f32.mrb[0].mxu0
        %1952 = vmatprep.mubr.bf16.mxu0 0
        %1953 = vmatmul.mubr.bf16.gmra.mrb[0].mxu0 %v738
        %v1954 = vpop.f32.mrb[0].mxu0
        %v1955 = vadd.f32 0.0, %v1954
        %v1956 = vpop.f32.mrb[0].mxu0
        %v1957 = vpop.f32.mrb[0].mxu0
        %v1958 = vadd.f32 0.0, %v1957
        %v1959 = vpop.f32.mrb[0].mxu0
        %1960 = vmatprep.mubr.bf16.mxu0 0
        %1961 = vmatmul.mubr.bf16.gmra.mrb[0].mxu0 %v741
        %v1962 = vpop.f32.mrb[0].mxu0
        %v1963 = vadd.f32 0.0, %v1962
        %v1964 = vpop.f32.mrb[0].mxu0
        %v1965 = vpop.f32.mrb[0].mxu0
        %v1966 = vadd.f32 0.0, %v1965
        %v1967 = vpop.f32.mrb[0].mxu0
        %1968 = vmatprep.mubr.bf16.mxu0 0
        %1969 = vmatmul.mubr.bf16.gmra.mrb[0].mxu0 %v744
        %v1970 = vpop.f32.mrb[0].mxu0
        %v1971 = vadd.f32 0.0, %v1970
        %v1972 = vpop.f32.mrb[0].mxu0
        %v1973 = vpop.f32.mrb[0].mxu0
        %v1974 = vadd.f32 0.0, %v1973
        %v1975 = vpop.f32.mrb[0].mxu0
        %1976 = vmatprep.mubr.bf16.mxu0 0
        %1977 = vmatmul.mubr.bf16.gmra.mrb[0].mxu0 %v747
        %v1978 = vpop.f32.mrb[0].mxu0
        %v1979 = vadd.f32 0.0, %v1978
        %v1980 = vpop.f32.mrb[0].mxu0
        %v1981 = vpop.f32.mrb[0].mxu0
        %v1982 = vadd.f32 0.0, %v1981
        %v1983 = vpop.f32.mrb[0].mxu0
        %1984 = vmatprep.mubr.bf16.mxu0 0
        %1985 = vmatmul.mubr.bf16.gmra.mrb[0].mxu0 %v750
        %v1986 = vpop.f32.mrb[0].mxu0
        %v1987 = vadd.f32 0.0, %v1986
        %v1988 = vpop.f32.mrb[0].mxu0
        %v1989 = vpop.f32.mrb[0].mxu0
        %v1990 = vadd.f32 0.0, %v1989
        %v1991 = vpop.f32.mrb[0].mxu0
        %1992 = vmatprep.mubr.bf16.mxu0 0
        %1993 = vmatmul.mubr.bf16.gmra.mrb[0].mxu0 %v753
        %v1994 = vpop.f32.mrb[0].mxu0
        %v1995 = vadd.f32 0.0, %v1994
        %v1996 = vpop.f32.mrb[0].mxu0
        %v1997 = vpop.f32.mrb[0].mxu0
        %v1998 = vadd.f32 0.0, %v1997
        %v1999 = vpop.f32.mrb[0].mxu0
        %2000 = vmatprep.mubr.bf16.mxu0 0
        %2001 = vmatmul.mubr.bf16.gmra.mrb[0].mxu0 %v756
        %v2002 = vpop.f32.mrb[0].mxu0
        %v2003 = vadd.f32 0.0, %v2002
        %v2004 = vpop.f32.mrb[0].mxu0
        %v2005 = vpop.f32.mrb[0].mxu0
        %v2006 = vadd.f32 0.0, %v2005
        %v2007 = vpop.f32.mrb[0].mxu0
        %2008 = vmatprep.mubr.bf16.mxu0 0
        %2009 = vmatmul.mubr.bf16.gmra.mrb[0].mxu0 %v759
        %v2010 = vpop.f32.mrb[0].mxu0
        %v2011 = vadd.f32 0.0, %v2010
        %v2012 = vpop.f32.mrb[0].mxu0
        %v2013 = vpop.f32.mrb[0].mxu0
        %v2014 = vadd.f32 0.0, %v2013
        %v2015 = vpop.f32.mrb[0].mxu0
        %2016 = vmatprep.mubr.bf16.mxu0 0
        %2017 = vmatmul.mubr.bf16.gmra.mrb[0].mxu0 %v762
        %v2018 = vpop.f32.mrb[0].mxu0
        %v2019 = vadd.f32 0.0, %v2018
        %v2020 = vpop.f32.mrb[0].mxu0
        %v2021 = vpop.f32.mrb[0].mxu0
        %v2022 = vadd.f32 0.0, %v2021
        %v2023 = vpop.f32.mrb[0].mxu0
        %2024 = vmatprep.mubr.bf16.mxu0 0
        %2025 = vmatmul.mubr.bf16.gmra.mrb[0].mxu0 %v765
        %v2026 = vpop.f32.mrb[0].mxu0
        %v2027 = vadd.f32 0.0, %v2026
        %v2028 = vpop.f32.mrb[0].mxu0
        %v2029 = vpop.f32.mrb[0].mxu0
        %v2030 = vadd.f32 0.0, %v2029
        %v2031 = vpop.f32.mrb[0].mxu0
        %2032 = vmatprep.mubr.bf16.mxu0 0
        %2033 = vmatmul.mubr.bf16.gmra.mrb[0].mxu0 %v768
        %v2034 = vpop.f32.mrb[0].mxu0
        %v2035 = vadd.f32 0.0, %v2034
        %v2036 = vpop.f32.mrb[0].mxu0
        %v2037 = vpop.f32.mrb[0].mxu0
        %v2038 = vadd.f32 0.0, %v2037
        %v2039 = vpop.f32.mrb[0].mxu0
        %2040 = vmatprep.mubr.bf16.mxu0 0
        %2041 = vmatmul.mubr.bf16.gmra.mrb[0].mxu0 %v771
        %v2042 = vpop.f32.mrb[0].mxu0
        %v2043 = vadd.f32 0.0, %v2042
        %v2044 = vpop.f32.mrb[0].mxu0
        %v2045 = vpop.f32.mrb[0].mxu0
        %v2046 = vadd.f32 0.0, %v2045
        %v2047 = vpop.f32.mrb[0].mxu0
        %2048 = vmatprep.mubr.bf16.mxu0 0
        %2049 = vmatmul.mubr.bf16.gmra.mrb[0].mxu0 %v1891
        %v2050 = vpop.f32.mrb[0].mxu0
        %v2051 = vadd.f32 0.0, %v2050
        %v2052 = vpop.f32.mrb[0].mxu0
        %v2053 = vpop.f32.mrb[0].mxu0
        %v2054 = vadd.f32 0.0, %v2053
        %v2055 = vpop.f32.mrb[0].mxu0
        %2056 = vdwg.mxu0
        %v2057 = vadd.f32 %v1829, %v1931
        %v2058 = vadd.f32 %v1830, %v1934
        %v2059 = vadd.f32 %v1831, %v1939
        %v2060 = vadd.f32 %v1832, %v1942
        %v2061 = vadd.f32 %v1833, %v1947
        %v2062 = vadd.f32 %v1834, %v1950
        %v2063 = vadd.f32 %v1835, %v1955
        %v2064 = vadd.f32 %v1836, %v1958
        %v2065 = vadd.f32 %v1837, %v1963
        %v2066 = vadd.f32 %v1838, %v1966
        %v2067 = vadd.f32 %v1839, %v1971
        %v2068 = vadd.f32 %v1840, %v1974
        %v2069 = vadd.f32 %v1841, %v1979
        %v2070 = vadd.f32 %v1842, %v1982
        %v2071 = vadd.f32 %v1843, %v1987
        %v2072 = vadd.f32 %v1844, %v1990
        %v2073 = vadd.f32 %v1845, %v1995
        %v2074 = vadd.f32 %v1846, %v1998
        %v2075 = vadd.f32 %v1847, %v2003
        %v2076 = vadd.f32 %v1848, %v2006
        %v2077 = vadd.f32 %v1849, %v2011
        %v2078 = vadd.f32 %v1850, %v2014
        %v2079 = vadd.f32 %v1851, %v2019
        %v2080 = vadd.f32 %v1852, %v2022
        %v2081 = vadd.f32 %v1853, %v2027
        %v2082 = vadd.f32 %v1854, %v2030
        %v2083 = vadd.f32 %v1855, %v2035
        %v2084 = vadd.f32 %v1856, %v2038
        %v2085 = vadd.f32 %v1857, %v2043
        %v2086 = vadd.f32 %v1858, %v2046
        %v2087 = vadd.f32 %v1859, %v2051
        %v2088 = vadd.f32 %v1860, %v2054
        %v2090 = vrot.slane %v280, 5
        %v2091 = vrot.slane %v2090, 4
        %v2092 = vrot.slane %v281, 5
        %v2093 = vsel %vm1248, %v2091, %v2092
        %v2094 = vrot.slane %v2092, 4
        %v2095 = vrot.slane %v282, 5
        %v2096 = vsel %vm1248, %v2094, %v2095
        %s2097 = scalar_lea.vmem %s227, 10
        %v2098 = vld [vmem:[%s2097] sm:$0x3]
        %v2099 = vunpack.c.l.b16 %v2093
        %v2100 = vunpack.c.l.b16 %v2096
        %v2101 = vpack.c.b16 %v2100, %v2099
        %v2103 = vsel %vm724, %v2101, 0
        %v2106 = vsel %vm773, %v2098, 0
        %2108 = vmatprep.subr.bf16.mxu0 0
        %2109 = vmatpush1.bf16.msra.mxu0 %v2106
        %2110 = vmatprep.subr.bf16.mxu0 0
        %2111 = vmatpush1.bf16.msra.mxu0 0
        %2112 = vmatprep.subr.bf16.mxu0 0
        %2113 = vmatpush1.bf16.msra.mxu0 0
        %2114 = vmatprep.subr.bf16.mxu0 0
        %2115 = vmatpush1.bf16.msra.mxu0 0
        %2116 = vmatprep.subr.bf16.mxu0 0
        %2117 = vmatpush1.bf16.msra.mxu0 0
        %2118 = vmatprep.subr.bf16.mxu0 0
        %2119 = vmatpush1.bf16.msra.mxu0 0
        %2120 = vmatprep.subr.bf16.mxu0 0
        %2121 = vmatpush1.bf16.msra.mxu0 0
        %2122 = vmatprep.subr.bf16.mxu0 0
        %2123 = vmatpush1.bf16.msra.mxu0 0
        %2124 = vmatprep.subr.bf16.mxu0 0
        %2125 = vmatpush1.bf16.msra.mxu0 0
        %2126 = vmatprep.subr.bf16.mxu0 0
        %2127 = vmatpush1.bf16.msra.mxu0 0
        %2128 = vmatprep.subr.bf16.mxu0 0
        %2129 = vmatpush1.bf16.msra.mxu0 0
        %2130 = vmatprep.subr.bf16.mxu0 0
        %2131 = vmatpush1.bf16.msra.mxu0 0
        %2132 = vmatprep.subr.bf16.mxu0 0
        %2133 = vmatpush1.bf16.msra.mxu0 0
        %2134 = vmatprep.subr.bf16.mxu0 0
        %2135 = vmatpush1.bf16.msra.mxu0 0
        %2136 = vmatprep.subr.bf16.mxu0 0
        %2137 = vmatpush1.bf16.msra.mxu0 0
        %2138 = vmatprep.subr.bf16.mxu0 0
        %2139 = vmatpush1.bf16.msra.mxu0 0
        %2140 = vmatprep.mubr.bf16.mxu0 0
        %2141 = vmatmul.mubr.bf16.gmra.mrb[0].mxu0 %v1415
        %v2142 = vpop.f32.mrb[0].mxu0
        %v2143 = vadd.f32 0.0, %v2142
        %v2144 = vpop.f32.mrb[0].mxu0
        %v2145 = vpop.f32.mrb[0].mxu0
        %v2146 = vadd.f32 0.0, %v2145
        %v2147 = vpop.f32.mrb[0].mxu0
        %2148 = vmatprep.mubr.bf16.mxu0 0
        %2149 = vmatmul.mubr.bf16.gmra.mrb[0].mxu0 %v1418
        %v2150 = vpop.f32.mrb[0].mxu0
        %v2151 = vadd.f32 0.0, %v2150
        %v2152 = vpop.f32.mrb[0].mxu0
        %v2153 = vpop.f32.mrb[0].mxu0
        %v2154 = vadd.f32 0.0, %v2153
        %v2155 = vpop.f32.mrb[0].mxu0
        %2156 = vmatprep.mubr.bf16.mxu0 0
        %2157 = vmatmul.mubr.bf16.gmra.mrb[0].mxu0 %v1421
        %v2158 = vpop.f32.mrb[0].mxu0
        %v2159 = vadd.f32 0.0, %v2158
        %v2160 = vpop.f32.mrb[0].mxu0
        %v2161 = vpop.f32.mrb[0].mxu0
        %v2162 = vadd.f32 0.0, %v2161
        %v2163 = vpop.f32.mrb[0].mxu0
        %2164 = vmatprep.mubr.bf16.mxu0 0
        %2165 = vmatmul.mubr.bf16.gmra.mrb[0].mxu0 %v1424
        %v2166 = vpop.f32.mrb[0].mxu0
        %v2167 = vadd.f32 0.0, %v2166
        %v2168 = vpop.f32.mrb[0].mxu0
        %v2169 = vpop.f32.mrb[0].mxu0
        %v2170 = vadd.f32 0.0, %v2169
        %v2171 = vpop.f32.mrb[0].mxu0
        %2172 = vmatprep.mubr.bf16.mxu0 0
        %2173 = vmatmul.mubr.bf16.gmra.mrb[0].mxu0 %v1427
        %v2174 = vpop.f32.mrb[0].mxu0
        %v2175 = vadd.f32 0.0, %v2174
        %v2176 = vpop.f32.mrb[0].mxu0
        %v2177 = vpop.f32.mrb[0].mxu0
        %v2178 = vadd.f32 0.0, %v2177
        %v2179 = vpop.f32.mrb[0].mxu0
        %2180 = vmatprep.mubr.bf16.mxu0 0
        %2181 = vmatmul.mubr.bf16.gmra.mrb[0].mxu0 %v1430
        %v2182 = vpop.f32.mrb[0].mxu0
        %v2183 = vadd.f32 0.0, %v2182
        %v2184 = vpop.f32.mrb[0].mxu0
        %v2185 = vpop.f32.mrb[0].mxu0
        %v2186 = vadd.f32 0.0, %v2185
        %v2187 = vpop.f32.mrb[0].mxu0
        %2188 = vmatprep.mubr.bf16.mxu0 0
        %2189 = vmatmul.mubr.bf16.gmra.mrb[0].mxu0 %v1433
        %v2190 = vpop.f32.mrb[0].mxu0
        %v2191 = vadd.f32 0.0, %v2190
        %v2192 = vpop.f32.mrb[0].mxu0
        %v2193 = vpop.f32.mrb[0].mxu0
        %v2194 = vadd.f32 0.0, %v2193
        %v2195 = vpop.f32.mrb[0].mxu0
        %2196 = vmatprep.mubr.bf16.mxu0 0
        %2197 = vmatmul.mubr.bf16.gmra.mrb[0].mxu0 %v1436
        %v2198 = vpop.f32.mrb[0].mxu0
        %v2199 = vadd.f32 0.0, %v2198
        %v2200 = vpop.f32.mrb[0].mxu0
        %v2201 = vpop.f32.mrb[0].mxu0
        %v2202 = vadd.f32 0.0, %v2201
        %v2203 = vpop.f32.mrb[0].mxu0
        %2204 = vmatprep.mubr.bf16.mxu0 0
        %2205 = vmatmul.mubr.bf16.gmra.mrb[0].mxu0 %v1439
        %v2206 = vpop.f32.mrb[0].mxu0
        %v2207 = vadd.f32 0.0, %v2206
        %v2208 = vpop.f32.mrb[0].mxu0
        %v2209 = vpop.f32.mrb[0].mxu0
        %v2210 = vadd.f32 0.0, %v2209
        %v2211 = vpop.f32.mrb[0].mxu0
        %2212 = vmatprep.mubr.bf16.mxu0 0
        %2213 = vmatmul.mubr.bf16.gmra.mrb[0].mxu0 %v1442
        %v2214 = vpop.f32.mrb[0].mxu0
        %v2215 = vadd.f32 0.0, %v2214
        %v2216 = vpop.f32.mrb[0].mxu0
        %v2217 = vpop.f32.mrb[0].mxu0
        %v2218 = vadd.f32 0.0, %v2217
        %v2219 = vpop.f32.mrb[0].mxu0
        %2220 = vmatprep.mubr.bf16.mxu0 0
        %2221 = vmatmul.mubr.bf16.gmra.mrb[0].mxu0 %v1445
        %v2222 = vpop.f32.mrb[0].mxu0
        %v2223 = vadd.f32 0.0, %v2222
        %v2224 = vpop.f32.mrb[0].mxu0
        %v2225 = vpop.f32.mrb[0].mxu0
        %v2226 = vadd.f32 0.0, %v2225
        %v2227 = vpop.f32.mrb[0].mxu0
        %2228 = vmatprep.mubr.bf16.mxu0 0
        %2229 = vmatmul.mubr.bf16.gmra.mrb[0].mxu0 %v1448
        %v2230 = vpop.f32.mrb[0].mxu0
        %v2231 = vadd.f32 0.0, %v2230
        %v2232 = vpop.f32.mrb[0].mxu0
        %v2233 = vpop.f32.mrb[0].mxu0
        %v2234 = vadd.f32 0.0, %v2233
        %v2235 = vpop.f32.mrb[0].mxu0
        %2236 = vmatprep.mubr.bf16.mxu0 0
        %2237 = vmatmul.mubr.bf16.gmra.mrb[0].mxu0 %v1451
        %v2238 = vpop.f32.mrb[0].mxu0
        %v2239 = vadd.f32 0.0, %v2238
        %v2240 = vpop.f32.mrb[0].mxu0
        %v2241 = vpop.f32.mrb[0].mxu0
        %v2242 = vadd.f32 0.0, %v2241
        %v2243 = vpop.f32.mrb[0].mxu0
        %2244 = vmatprep.mubr.bf16.mxu0 0
        %2245 = vmatmul.mubr.bf16.gmra.mrb[0].mxu0 %v1454
        %v2246 = vpop.f32.mrb[0].mxu0
        %v2247 = vadd.f32 0.0, %v2246
        %v2248 = vpop.f32.mrb[0].mxu0
        %v2249 = vpop.f32.mrb[0].mxu0
        %v2250 = vadd.f32 0.0, %v2249
        %v2251 = vpop.f32.mrb[0].mxu0
        %2252 = vmatprep.mubr.bf16.mxu0 0
        %2253 = vmatmul.mubr.bf16.gmra.mrb[0].mxu0 %v1457
        %v2254 = vpop.f32.mrb[0].mxu0
        %v2255 = vadd.f32 0.0, %v2254
        %v2256 = vpop.f32.mrb[0].mxu0
        %v2257 = vpop.f32.mrb[0].mxu0
        %v2258 = vadd.f32 0.0, %v2257
        %v2259 = vpop.f32.mrb[0].mxu0
        %2260 = vmatprep.mubr.bf16.mxu0 0
        %2261 = vmatmul.mubr.bf16.gmra.mrb[0].mxu0 %v2103
        %v2262 = vpop.f32.mrb[0].mxu0
        %v2263 = vadd.f32 0.0, %v2262
        %v2264 = vpop.f32.mrb[0].mxu0
        %v2265 = vpop.f32.mrb[0].mxu0
        %v2266 = vadd.f32 0.0, %v2265
        %v2267 = vpop.f32.mrb[0].mxu0
        %2268 = vdwg.mxu0
        %v2269 = vadd.f32 %v2057, %v2143
        %v2270 = vadd.f32 %v2058, %v2146
        %v2271 = vadd.f32 %v2059, %v2151
        %v2272 = vadd.f32 %v2060, %v2154
        %v2273 = vadd.f32 %v2061, %v2159
        %v2274 = vadd.f32 %v2062, %v2162
        %v2275 = vadd.f32 %v2063, %v2167
        %v2276 = vadd.f32 %v2064, %v2170
        %v2277 = vadd.f32 %v2065, %v2175
        %v2278 = vadd.f32 %v2066, %v2178
        %v2279 = vadd.f32 %v2067, %v2183
        %v2280 = vadd.f32 %v2068, %v2186
        %v2281 = vadd.f32 %v2069, %v2191
        %v2282 = vadd.f32 %v2070, %v2194
        %v2283 = vadd.f32 %v2071, %v2199
        %v2284 = vadd.f32 %v2072, %v2202
        %v2285 = vadd.f32 %v2073, %v2207
        %v2286 = vadd.f32 %v2074, %v2210
        %v2287 = vadd.f32 %v2075, %v2215
        %v2288 = vadd.f32 %v2076, %v2218
        %v2289 = vadd.f32 %v2077, %v2223
        %v2290 = vadd.f32 %v2078, %v2226
        %v2291 = vadd.f32 %v2079, %v2231
        %v2292 = vadd.f32 %v2080, %v2234
        %v2293 = vadd.f32 %v2081, %v2239
        %v2294 = vadd.f32 %v2082, %v2242
        %v2295 = vadd.f32 %v2083, %v2247
        %v2296 = vadd.f32 %v2084, %v2250
        %v2297 = vadd.f32 %v2085, %v2255
        %v2298 = vadd.f32 %v2086, %v2258
        %v2299 = vadd.f32 %v2087, %v2263
        %v2300 = vadd.f32 %v2088, %v2266
        %s2301 = scalar_lea.vmem %s227, 12
        %v2302 = vld [vmem:[%s2301] sm:$0x3]
        %v2305 = vunpack.c.l.b16 %v283
        %v2306 = vunpack.c.l.b16 %v284
        %v2307 = vpack.c.b16 %v2306, %v2305
        %v2309 = vsel %vm724, %v2307, 0
        %v2312 = vsel %vm773, %v2302, 0
        %2314 = vmatprep.subr.bf16.mxu0 0
        %2315 = vmatpush1.bf16.msra.mxu0 %v2312
        %2316 = vmatprep.subr.bf16.mxu0 0
        %2317 = vmatpush1.bf16.msra.mxu0 0
        %2318 = vmatprep.subr.bf16.mxu0 0
        %2319 = vmatpush1.bf16.msra.mxu0 0
        %2320 = vmatprep.subr.bf16.mxu0 0
        %2321 = vmatpush1.bf16.msra.mxu0 0
        %2322 = vmatprep.subr.bf16.mxu0 0
        %2323 = vmatpush1.bf16.msra.mxu0 0
        %2324 = vmatprep.subr.bf16.mxu0 0
        %2325 = vmatpush1.bf16.msra.mxu0 0
        %2326 = vmatprep.subr.bf16.mxu0 0
        %2327 = vmatpush1.bf16.msra.mxu0 0
        %2328 = vmatprep.subr.bf16.mxu0 0
        %2329 = vmatpush1.bf16.msra.mxu0 0
        %2330 = vmatprep.subr.bf16.mxu0 0
        %2331 = vmatpush1.bf16.msra.mxu0 0
        %2332 = vmatprep.subr.bf16.mxu0 0
        %2333 = vmatpush1.bf16.msra.mxu0 0
        %2334 = vmatprep.subr.bf16.mxu0 0
        %2335 = vmatpush1.bf16.msra.mxu0 0
        %2336 = vmatprep.subr.bf16.mxu0 0
        %2337 = vmatpush1.bf16.msra.mxu0 0
        %2338 = vmatprep.subr.bf16.mxu0 0
        %2339 = vmatpush1.bf16.msra.mxu0 0
        %2340 = vmatprep.subr.bf16.mxu0 0
        %2341 = vmatpush1.bf16.msra.mxu0 0
        %2342 = vmatprep.subr.bf16.mxu0 0
        %2343 = vmatpush1.bf16.msra.mxu0 0
        %2344 = vmatprep.subr.bf16.mxu0 0
        %2345 = vmatpush1.bf16.msra.mxu0 0
        %2346 = vmatprep.mubr.bf16.mxu0 0
        %2347 = vmatmul.mubr.bf16.gmra.mrb[0].mxu0 %v1025
        %v2348 = vpop.f32.mrb[0].mxu0
        %v2349 = vadd.f32 0.0, %v2348
        %v2350 = vpop.f32.mrb[0].mxu0
        %v2351 = vpop.f32.mrb[0].mxu0
        %v2352 = vadd.f32 0.0, %v2351
        %v2353 = vpop.f32.mrb[0].mxu0
        %2354 = vmatprep.mubr.bf16.mxu0 0
        %2355 = vmatmul.mubr.bf16.gmra.mrb[0].mxu0 %v1028
        %v2356 = vpop.f32.mrb[0].mxu0
        %v2357 = vadd.f32 0.0, %v2356
        %v2358 = vpop.f32.mrb[0].mxu0
        %v2359 = vpop.f32.mrb[0].mxu0
        %v2360 = vadd.f32 0.0, %v2359
        %v2361 = vpop.f32.mrb[0].mxu0
        %2362 = vmatprep.mubr.bf16.mxu0 0
        %2363 = vmatmul.mubr.bf16.gmra.mrb[0].mxu0 %v1031
        %v2364 = vpop.f32.mrb[0].mxu0
        %v2365 = vadd.f32 0.0, %v2364
        %v2366 = vpop.f32.mrb[0].mxu0
        %v2367 = vpop.f32.mrb[0].mxu0
        %v2368 = vadd.f32 0.0, %v2367
        %v2369 = vpop.f32.mrb[0].mxu0
        %2370 = vmatprep.mubr.bf16.mxu0 0
        %2371 = vmatmul.mubr.bf16.gmra.mrb[0].mxu0 %v1034
        %v2372 = vpop.f32.mrb[0].mxu0
        %v2373 = vadd.f32 0.0, %v2372
        %v2374 = vpop.f32.mrb[0].mxu0
        %v2375 = vpop.f32.mrb[0].mxu0
        %v2376 = vadd.f32 0.0, %v2375
        %v2377 = vpop.f32.mrb[0].mxu0
        %2378 = vmatprep.mubr.bf16.mxu0 0
        %2379 = vmatmul.mubr.bf16.gmra.mrb[0].mxu0 %v1037
        %v2380 = vpop.f32.mrb[0].mxu0
        %v2381 = vadd.f32 0.0, %v2380
        %v2382 = vpop.f32.mrb[0].mxu0
        %v2383 = vpop.f32.mrb[0].mxu0
        %v2384 = vadd.f32 0.0, %v2383
        %v2385 = vpop.f32.mrb[0].mxu0
        %2386 = vmatprep.mubr.bf16.mxu0 0
        %2387 = vmatmul.mubr.bf16.gmra.mrb[0].mxu0 %v1040
        %v2388 = vpop.f32.mrb[0].mxu0
        %v2389 = vadd.f32 0.0, %v2388
        %v2390 = vpop.f32.mrb[0].mxu0
        %v2391 = vpop.f32.mrb[0].mxu0
        %v2392 = vadd.f32 0.0, %v2391
        %v2393 = vpop.f32.mrb[0].mxu0
        %2394 = vmatprep.mubr.bf16.mxu0 0
        %2395 = vmatmul.mubr.bf16.gmra.mrb[0].mxu0 %v1043
        %v2396 = vpop.f32.mrb[0].mxu0
        %v2397 = vadd.f32 0.0, %v2396
        %v2398 = vpop.f32.mrb[0].mxu0
        %v2399 = vpop.f32.mrb[0].mxu0
        %v2400 = vadd.f32 0.0, %v2399
        %v2401 = vpop.f32.mrb[0].mxu0
        %2402 = vmatprep.mubr.bf16.mxu0 0
        %2403 = vmatmul.mubr.bf16.gmra.mrb[0].mxu0 %v1046
        %v2404 = vpop.f32.mrb[0].mxu0
        %v2405 = vadd.f32 0.0, %v2404
        %v2406 = vpop.f32.mrb[0].mxu0
        %v2407 = vpop.f32.mrb[0].mxu0
        %v2408 = vadd.f32 0.0, %v2407
        %v2409 = vpop.f32.mrb[0].mxu0
        %2410 = vmatprep.mubr.bf16.mxu0 0
        %2411 = vmatmul.mubr.bf16.gmra.mrb[0].mxu0 %v1049
        %v2412 = vpop.f32.mrb[0].mxu0
        %v2413 = vadd.f32 0.0, %v2412
        %v2414 = vpop.f32.mrb[0].mxu0
        %v2415 = vpop.f32.mrb[0].mxu0
        %v2416 = vadd.f32 0.0, %v2415
        %v2417 = vpop.f32.mrb[0].mxu0
        %2418 = vmatprep.mubr.bf16.mxu0 0
        %2419 = vmatmul.mubr.bf16.gmra.mrb[0].mxu0 %v1052
        %v2420 = vpop.f32.mrb[0].mxu0
        %v2421 = vadd.f32 0.0, %v2420
        %v2422 = vpop.f32.mrb[0].mxu0
        %v2423 = vpop.f32.mrb[0].mxu0
        %v2424 = vadd.f32 0.0, %v2423
        %v2425 = vpop.f32.mrb[0].mxu0
        %2426 = vmatprep.mubr.bf16.mxu0 0
        %2427 = vmatmul.mubr.bf16.gmra.mrb[0].mxu0 %v1055
        %v2428 = vpop.f32.mrb[0].mxu0
        %v2429 = vadd.f32 0.0, %v2428
        %v2430 = vpop.f32.mrb[0].mxu0
        %v2431 = vpop.f32.mrb[0].mxu0
        %v2432 = vadd.f32 0.0, %v2431
        %v2433 = vpop.f32.mrb[0].mxu0
        %2434 = vmatprep.mubr.bf16.mxu0 0
        %2435 = vmatmul.mubr.bf16.gmra.mrb[0].mxu0 %v1058
        %v2436 = vpop.f32.mrb[0].mxu0
        %v2437 = vadd.f32 0.0, %v2436
        %v2438 = vpop.f32.mrb[0].mxu0
        %v2439 = vpop.f32.mrb[0].mxu0
        %v2440 = vadd.f32 0.0, %v2439
        %v2441 = vpop.f32.mrb[0].mxu0
        %2442 = vmatprep.mubr.bf16.mxu0 0
        %2443 = vmatmul.mubr.bf16.gmra.mrb[0].mxu0 %v1061
        %v2444 = vpop.f32.mrb[0].mxu0
        %v2445 = vadd.f32 0.0, %v2444
        %v2446 = vpop.f32.mrb[0].mxu0
        %v2447 = vpop.f32.mrb[0].mxu0
        %v2448 = vadd.f32 0.0, %v2447
        %v2449 = vpop.f32.mrb[0].mxu0
        %2450 = vmatprep.mubr.bf16.mxu0 0
        %2451 = vmatmul.mubr.bf16.gmra.mrb[0].mxu0 %v1064
        %v2452 = vpop.f32.mrb[0].mxu0
        %v2453 = vadd.f32 0.0, %v2452
        %v2454 = vpop.f32.mrb[0].mxu0
        %v2455 = vpop.f32.mrb[0].mxu0
        %v2456 = vadd.f32 0.0, %v2455
        %v2457 = vpop.f32.mrb[0].mxu0
        %2458 = vmatprep.mubr.bf16.mxu0 0
        %2459 = vmatmul.mubr.bf16.gmra.mrb[0].mxu0 %v1663
        %v2460 = vpop.f32.mrb[0].mxu0
        %v2461 = vadd.f32 0.0, %v2460
        %v2462 = vpop.f32.mrb[0].mxu0
        %v2463 = vpop.f32.mrb[0].mxu0
        %v2464 = vadd.f32 0.0, %v2463
        %v2465 = vpop.f32.mrb[0].mxu0
        %2466 = vmatprep.mubr.bf16.mxu0 0
        %2467 = vmatmul.mubr.bf16.gmra.mrb[0].mxu0 %v2309
        %v2468 = vpop.f32.mrb[0].mxu0
        %v2469 = vadd.f32 0.0, %v2468
        %v2470 = vpop.f32.mrb[0].mxu0
        %v2471 = vpop.f32.mrb[0].mxu0
        %v2472 = vadd.f32 0.0, %v2471
        %v2473 = vpop.f32.mrb[0].mxu0
        %2474 = vdwg.mxu0
        %v2475 = vadd.f32 %v2269, %v2349
        %v2476 = vadd.f32 %v2270, %v2352
        %v2477 = vadd.f32 %v2271, %v2357
        %v2478 = vadd.f32 %v2272, %v2360
        %v2479 = vadd.f32 %v2273, %v2365
        %v2480 = vadd.f32 %v2274, %v2368
        %v2481 = vadd.f32 %v2275, %v2373
        %v2482 = vadd.f32 %v2276, %v2376
        %v2483 = vadd.f32 %v2277, %v2381
        %v2484 = vadd.f32 %v2278, %v2384
        %v2485 = vadd.f32 %v2279, %v2389
        %v2486 = vadd.f32 %v2280, %v2392
        %v2487 = vadd.f32 %v2281, %v2397
        %v2488 = vadd.f32 %v2282, %v2400
        %v2489 = vadd.f32 %v2283, %v2405
        %v2490 = vadd.f32 %v2284, %v2408
        %v2491 = vadd.f32 %v2285, %v2413
        %v2492 = vadd.f32 %v2286, %v2416
        %v2493 = vadd.f32 %v2287, %v2421
        %v2494 = vadd.f32 %v2288, %v2424
        %v2495 = vadd.f32 %v2289, %v2429
        %v2496 = vadd.f32 %v2290, %v2432
        %v2497 = vadd.f32 %v2291, %v2437
        %v2498 = vadd.f32 %v2292, %v2440
        %v2499 = vadd.f32 %v2293, %v2445
        %v2500 = vadd.f32 %v2294, %v2448
        %v2501 = vadd.f32 %v2295, %v2453
        %v2502 = vadd.f32 %v2296, %v2456
        %v2503 = vadd.f32 %v2297, %v2461
        %v2504 = vadd.f32 %v2298, %v2464
        %v2505 = vadd.f32 %v2299, %v2469
        %v2506 = vadd.f32 %v2300, %v2472
        %v2508 = vshrl.u32 %v283, 16
        %v2510 = vrot.slane %v2508, 4
        %v2511 = vshll.u32 %v283, 16
        %v2513 = vrot.slane %v2511, 5
        %v2514 = vor.u32 %v2510, %v2513
        %v2515 = vrot.slane %v2514, 4
        %v2517 = vshll.u32 %v284, 16
        %v2519 = vrot.slane %v2517, 5
        %v2520 = vsel %vm289, %v2515, %v2519
        %v2521 = vshrl.u32 %v284, 16
        %v2523 = vrot.slane %v2521, 4
        %v2524 = vor.u32 %v2523, %v2519
        %v2525 = vrot.slane %v2524, 4
        %v2527 = vshll.u32 %v285, 16
        %v2529 = vrot.slane %v2527, 5
        %v2530 = vsel %vm289, %v2525, %v2529
        %s2531 = scalar_lea.vmem %s227, 14
        %v2532 = vld [vmem:[%s2531] sm:$0x3]
        %v2533 = vunpack.c.l.b16 %v2520
        %v2534 = vunpack.c.l.b16 %v2530
        %v2535 = vpack.c.b16 %v2534, %v2533
        %v2537 = vsel %vm724, %v2535, 0
        %v2540 = vsel %vm773, %v2532, 0
        %2542 = vmatprep.subr.bf16.mxu0 0
        %2543 = vmatpush1.bf16.msra.mxu0 %v2540
        %2544 = vmatprep.subr.bf16.mxu0 0
        %2545 = vmatpush1.bf16.msra.mxu0 0
        %2546 = vmatprep.subr.bf16.mxu0 0
        %2547 = vmatpush1.bf16.msra.mxu0 0
        %2548 = vmatprep.subr.bf16.mxu0 0
        %2549 = vmatpush1.bf16.msra.mxu0 0
        %2550 = vmatprep.subr.bf16.mxu0 0
        %2551 = vmatpush1.bf16.msra.mxu0 0
        %2552 = vmatprep.subr.bf16.mxu0 0
        %2553 = vmatpush1.bf16.msra.mxu0 0
        %2554 = vmatprep.subr.bf16.mxu0 0
        %2555 = vmatpush1.bf16.msra.mxu0 0
        %2556 = vmatprep.subr.bf16.mxu0 0
        %2557 = vmatpush1.bf16.msra.mxu0 0
        %2558 = vmatprep.subr.bf16.mxu0 0
        %2559 = vmatpush1.bf16.msra.mxu0 0
        %2560 = vmatprep.subr.bf16.mxu0 0
        %2561 = vmatpush1.bf16.msra.mxu0 0
        %2562 = vmatprep.subr.bf16.mxu0 0
        %2563 = vmatpush1.bf16.msra.mxu0 0
        %2564 = vmatprep.subr.bf16.mxu0 0
        %2565 = vmatpush1.bf16.msra.mxu0 0
        %2566 = vmatprep.subr.bf16.mxu0 0
        %2567 = vmatpush1.bf16.msra.mxu0 0
        %2568 = vmatprep.subr.bf16.mxu0 0
        %2569 = vmatpush1.bf16.msra.mxu0 0
        %2570 = vmatprep.subr.bf16.mxu0 0
        %2571 = vmatpush1.bf16.msra.mxu0 0
        %2572 = vmatprep.subr.bf16.mxu0 0
        %2573 = vmatpush1.bf16.msra.mxu0 0
        %2574 = vmatprep.mubr.bf16.mxu0 0
        %2575 = vmatmul.mubr.bf16.gmra.mrb[0].mxu0 %v732
        %v2576 = vpop.f32.mrb[0].mxu0
        %v2577 = vadd.f32 0.0, %v2576
        %v2578 = vpop.f32.mrb[0].mxu0
        %v2579 = vpop.f32.mrb[0].mxu0
        %v2580 = vadd.f32 0.0, %v2579
        %v2581 = vpop.f32.mrb[0].mxu0
        %2582 = vmatprep.mubr.bf16.mxu0 0
        %2583 = vmatmul.mubr.bf16.gmra.mrb[0].mxu0 %v735
        %v2584 = vpop.f32.mrb[0].mxu0
        %v2585 = vadd.f32 0.0, %v2584
        %v2586 = vpop.f32.mrb[0].mxu0
        %v2587 = vpop.f32.mrb[0].mxu0
        %v2588 = vadd.f32 0.0, %v2587
        %v2589 = vpop.f32.mrb[0].mxu0
        %2590 = vmatprep.mubr.bf16.mxu0 0
        %2591 = vmatmul.mubr.bf16.gmra.mrb[0].mxu0 %v738
        %v2592 = vpop.f32.mrb[0].mxu0
        %v2593 = vadd.f32 0.0, %v2592
        %v2594 = vpop.f32.mrb[0].mxu0
        %v2595 = vpop.f32.mrb[0].mxu0
        %v2596 = vadd.f32 0.0, %v2595
        %v2597 = vpop.f32.mrb[0].mxu0
        %2598 = vmatprep.mubr.bf16.mxu0 0
        %2599 = vmatmul.mubr.bf16.gmra.mrb[0].mxu0 %v741
        %v2600 = vpop.f32.mrb[0].mxu0
        %v2601 = vadd.f32 0.0, %v2600
        %v2602 = vpop.f32.mrb[0].mxu0
        %v2603 = vpop.f32.mrb[0].mxu0
        %v2604 = vadd.f32 0.0, %v2603
        %v2605 = vpop.f32.mrb[0].mxu0
        %2606 = vmatprep.mubr.bf16.mxu0 0
        %2607 = vmatmul.mubr.bf16.gmra.mrb[0].mxu0 %v744
        %v2608 = vpop.f32.mrb[0].mxu0
        %v2609 = vadd.f32 0.0, %v2608
        %v2610 = vpop.f32.mrb[0].mxu0
        %v2611 = vpop.f32.mrb[0].mxu0
        %v2612 = vadd.f32 0.0, %v2611
        %v2613 = vpop.f32.mrb[0].mxu0
        %2614 = vmatprep.mubr.bf16.mxu0 0
        %2615 = vmatmul.mubr.bf16.gmra.mrb[0].mxu0 %v747
        %v2616 = vpop.f32.mrb[0].mxu0
        %v2617 = vadd.f32 0.0, %v2616
        %v2618 = vpop.f32.mrb[0].mxu0
        %v2619 = vpop.f32.mrb[0].mxu0
        %v2620 = vadd.f32 0.0, %v2619
        %v2621 = vpop.f32.mrb[0].mxu0
        %2622 = vmatprep.mubr.bf16.mxu0 0
        %2623 = vmatmul.mubr.bf16.gmra.mrb[0].mxu0 %v750
        %v2624 = vpop.f32.mrb[0].mxu0
        %v2625 = vadd.f32 0.0, %v2624
        %v2626 = vpop.f32.mrb[0].mxu0
        %v2627 = vpop.f32.mrb[0].mxu0
        %v2628 = vadd.f32 0.0, %v2627
        %v2629 = vpop.f32.mrb[0].mxu0
        %2630 = vmatprep.mubr.bf16.mxu0 0
        %2631 = vmatmul.mubr.bf16.gmra.mrb[0].mxu0 %v753
        %v2632 = vpop.f32.mrb[0].mxu0
        %v2633 = vadd.f32 0.0, %v2632
        %v2634 = vpop.f32.mrb[0].mxu0
        %v2635 = vpop.f32.mrb[0].mxu0
        %v2636 = vadd.f32 0.0, %v2635
        %v2637 = vpop.f32.mrb[0].mxu0
        %2638 = vmatprep.mubr.bf16.mxu0 0
        %2639 = vmatmul.mubr.bf16.gmra.mrb[0].mxu0 %v756
        %v2640 = vpop.f32.mrb[0].mxu0
        %v2641 = vadd.f32 0.0, %v2640
        %v2642 = vpop.f32.mrb[0].mxu0
        %v2643 = vpop.f32.mrb[0].mxu0
        %v2644 = vadd.f32 0.0, %v2643
        %v2645 = vpop.f32.mrb[0].mxu0
        %2646 = vmatprep.mubr.bf16.mxu0 0
        %2647 = vmatmul.mubr.bf16.gmra.mrb[0].mxu0 %v759
        %v2648 = vpop.f32.mrb[0].mxu0
        %v2649 = vadd.f32 0.0, %v2648
        %v2650 = vpop.f32.mrb[0].mxu0
        %v2651 = vpop.f32.mrb[0].mxu0
        %v2652 = vadd.f32 0.0, %v2651
        %v2653 = vpop.f32.mrb[0].mxu0
        %2654 = vmatprep.mubr.bf16.mxu0 0
        %2655 = vmatmul.mubr.bf16.gmra.mrb[0].mxu0 %v762
        %v2656 = vpop.f32.mrb[0].mxu0
        %v2657 = vadd.f32 0.0, %v2656
        %v2658 = vpop.f32.mrb[0].mxu0
        %v2659 = vpop.f32.mrb[0].mxu0
        %v2660 = vadd.f32 0.0, %v2659
        %v2661 = vpop.f32.mrb[0].mxu0
        %2662 = vmatprep.mubr.bf16.mxu0 0
        %2663 = vmatmul.mubr.bf16.gmra.mrb[0].mxu0 %v765
        %v2664 = vpop.f32.mrb[0].mxu0
        %v2665 = vadd.f32 0.0, %v2664
        %v2666 = vpop.f32.mrb[0].mxu0
        %v2667 = vpop.f32.mrb[0].mxu0
        %v2668 = vadd.f32 0.0, %v2667
        %v2669 = vpop.f32.mrb[0].mxu0
        %2670 = vmatprep.mubr.bf16.mxu0 0
        %2671 = vmatmul.mubr.bf16.gmra.mrb[0].mxu0 %v768
        %v2672 = vpop.f32.mrb[0].mxu0
        %v2673 = vadd.f32 0.0, %v2672
        %v2674 = vpop.f32.mrb[0].mxu0
        %v2675 = vpop.f32.mrb[0].mxu0
        %v2676 = vadd.f32 0.0, %v2675
        %v2677 = vpop.f32.mrb[0].mxu0
        %2678 = vmatprep.mubr.bf16.mxu0 0
        %2679 = vmatmul.mubr.bf16.gmra.mrb[0].mxu0 %v771
        %v2680 = vpop.f32.mrb[0].mxu0
        %v2681 = vadd.f32 0.0, %v2680
        %v2682 = vpop.f32.mrb[0].mxu0
        %v2683 = vpop.f32.mrb[0].mxu0
        %v2684 = vadd.f32 0.0, %v2683
        %v2685 = vpop.f32.mrb[0].mxu0
        %2686 = vmatprep.mubr.bf16.mxu0 0
        %2687 = vmatmul.mubr.bf16.gmra.mrb[0].mxu0 %v1891
        %v2688 = vpop.f32.mrb[0].mxu0
        %v2689 = vadd.f32 0.0, %v2688
        %v2690 = vpop.f32.mrb[0].mxu0
        %v2691 = vpop.f32.mrb[0].mxu0
        %v2692 = vadd.f32 0.0, %v2691
        %v2693 = vpop.f32.mrb[0].mxu0
        %2694 = vmatprep.mubr.bf16.mxu0 0
        %2695 = vmatmul.mubr.bf16.gmra.mrb[0].mxu0 %v2537
        %v2696 = vpop.f32.mrb[0].mxu0
        %v2697 = vadd.f32 0.0, %v2696
        %v2698 = vpop.f32.mrb[0].mxu0
        %v2699 = vpop.f32.mrb[0].mxu0
        %v2700 = vadd.f32 0.0, %v2699
        %v2701 = vpop.f32.mrb[0].mxu0
        %2702 = vdwg.mxu0
        %v2703 = vadd.f32 %v2475, %v2577
        %v2704 = vadd.f32 %v2476, %v2580
        %v2705 = vadd.f32 %v2477, %v2585
        %v2706 = vadd.f32 %v2478, %v2588
        %v2707 = vadd.f32 %v2479, %v2593
        %v2708 = vadd.f32 %v2480, %v2596
        %v2709 = vadd.f32 %v2481, %v2601
        %v2710 = vadd.f32 %v2482, %v2604
        %v2711 = vadd.f32 %v2483, %v2609
        %v2712 = vadd.f32 %v2484, %v2612
        %v2713 = vadd.f32 %v2485, %v2617
        %v2714 = vadd.f32 %v2486, %v2620
        %v2715 = vadd.f32 %v2487, %v2625
        %v2716 = vadd.f32 %v2488, %v2628
        %v2717 = vadd.f32 %v2489, %v2633
        %v2718 = vadd.f32 %v2490, %v2636
        %v2719 = vadd.f32 %v2491, %v2641
        %v2720 = vadd.f32 %v2492, %v2644
        %v2721 = vadd.f32 %v2493, %v2649
        %v2722 = vadd.f32 %v2494, %v2652
        %v2723 = vadd.f32 %v2495, %v2657
        %v2724 = vadd.f32 %v2496, %v2660
        %v2725 = vadd.f32 %v2497, %v2665
        %v2726 = vadd.f32 %v2498, %v2668
        %v2727 = vadd.f32 %v2499, %v2673
        %v2728 = vadd.f32 %v2500, %v2676
        %v2729 = vadd.f32 %v2501, %v2681
        %v2730 = vadd.f32 %v2502, %v2684
        %v2731 = vadd.f32 %v2503, %v2689
        %v2732 = vadd.f32 %v2504, %v2692
        %v2733 = vadd.f32 %v2505, %v2697
        %v2734 = vadd.f32 %v2506, %v2700
        %v2736 = vrot.slane %v283, 5
        %v2737 = vrot.slane %v2736, 4
        %v2738 = vrot.slane %v284, 5
        %v2739 = vsel %vm1248, %v2737, %v2738
        %v2740 = vrot.slane %v2738, 4
        %v2741 = vrot.slane %v285, 5
        %v2742 = vsel %vm1248, %v2740, %v2741
        %s2743 = scalar_lea.vmem %s227, 16
        %v2744 = vld [vmem:[%s2743] sm:$0x3]
        %v2745 = vunpack.c.l.b16 %v2739
        %v2746 = vunpack.c.l.b16 %v2742
        %v2747 = vpack.c.b16 %v2746, %v2745
        %v2749 = vsel %vm724, %v2747, 0
        %v2752 = vsel %vm773, %v2744, 0
        %2754 = vmatprep.subr.bf16.mxu0 0
        %2755 = vmatpush1.bf16.msra.mxu0 %v2752
        %2756 = vmatprep.subr.bf16.mxu0 0
        %2757 = vmatpush1.bf16.msra.mxu0 0
        %2758 = vmatprep.subr.bf16.mxu0 0
        %2759 = vmatpush1.bf16.msra.mxu0 0
        %2760 = vmatprep.subr.bf16.mxu0 0
        %2761 = vmatpush1.bf16.msra.mxu0 0
        %2762 = vmatprep.subr.bf16.mxu0 0
        %2763 = vmatpush1.bf16.msra.mxu0 0
        %2764 = vmatprep.subr.bf16.mxu0 0
        %2765 = vmatpush1.bf16.msra.mxu0 0
        %2766 = vmatprep.subr.bf16.mxu0 0
        %2767 = vmatpush1.bf16.msra.mxu0 0
        %2768 = vmatprep.subr.bf16.mxu0 0
        %2769 = vmatpush1.bf16.msra.mxu0 0
        %2770 = vmatprep.subr.bf16.mxu0 0
        %2771 = vmatpush1.bf16.msra.mxu0 0
        %2772 = vmatprep.subr.bf16.mxu0 0
        %2773 = vmatpush1.bf16.msra.mxu0 0
        %2774 = vmatprep.subr.bf16.mxu0 0
        %2775 = vmatpush1.bf16.msra.mxu0 0
        %2776 = vmatprep.subr.bf16.mxu0 0
        %2777 = vmatpush1.bf16.msra.mxu0 0
        %2778 = vmatprep.subr.bf16.mxu0 0
        %2779 = vmatpush1.bf16.msra.mxu0 0
        %2780 = vmatprep.subr.bf16.mxu0 0
        %2781 = vmatpush1.bf16.msra.mxu0 0
        %2782 = vmatprep.subr.bf16.mxu0 0
        %2783 = vmatpush1.bf16.msra.mxu0 0
        %2784 = vmatprep.subr.bf16.mxu0 0
        %2785 = vmatpush1.bf16.msra.mxu0 0
        %2786 = vmatprep.mubr.bf16.mxu0 0
        %2787 = vmatmul.mubr.bf16.gmra.mrb[0].mxu0 %v1418
        %v2788 = vpop.f32.mrb[0].mxu0
        %v2789 = vadd.f32 0.0, %v2788
        %v2790 = vpop.f32.mrb[0].mxu0
        %v2791 = vpop.f32.mrb[0].mxu0
        %v2792 = vadd.f32 0.0, %v2791
        %v2793 = vpop.f32.mrb[0].mxu0
        %2794 = vmatprep.mubr.bf16.mxu0 0
        %2795 = vmatmul.mubr.bf16.gmra.mrb[0].mxu0 %v1421
        %v2796 = vpop.f32.mrb[0].mxu0
        %v2797 = vadd.f32 0.0, %v2796
        %v2798 = vpop.f32.mrb[0].mxu0
        %v2799 = vpop.f32.mrb[0].mxu0
        %v2800 = vadd.f32 0.0, %v2799
        %v2801 = vpop.f32.mrb[0].mxu0
        %2802 = vmatprep.mubr.bf16.mxu0 0
        %2803 = vmatmul.mubr.bf16.gmra.mrb[0].mxu0 %v1424
        %v2804 = vpop.f32.mrb[0].mxu0
        %v2805 = vadd.f32 0.0, %v2804
        %v2806 = vpop.f32.mrb[0].mxu0
        %v2807 = vpop.f32.mrb[0].mxu0
        %v2808 = vadd.f32 0.0, %v2807
        %v2809 = vpop.f32.mrb[0].mxu0
        %2810 = vmatprep.mubr.bf16.mxu0 0
        %2811 = vmatmul.mubr.bf16.gmra.mrb[0].mxu0 %v1427
        %v2812 = vpop.f32.mrb[0].mxu0
        %v2813 = vadd.f32 0.0, %v2812
        %v2814 = vpop.f32.mrb[0].mxu0
        %v2815 = vpop.f32.mrb[0].mxu0
        %v2816 = vadd.f32 0.0, %v2815
        %v2817 = vpop.f32.mrb[0].mxu0
        %2818 = vmatprep.mubr.bf16.mxu0 0
        %2819 = vmatmul.mubr.bf16.gmra.mrb[0].mxu0 %v1430
        %v2820 = vpop.f32.mrb[0].mxu0
        %v2821 = vadd.f32 0.0, %v2820
        %v2822 = vpop.f32.mrb[0].mxu0
        %v2823 = vpop.f32.mrb[0].mxu0
        %v2824 = vadd.f32 0.0, %v2823
        %v2825 = vpop.f32.mrb[0].mxu0
        %2826 = vmatprep.mubr.bf16.mxu0 0
        %2827 = vmatmul.mubr.bf16.gmra.mrb[0].mxu0 %v1433
        %v2828 = vpop.f32.mrb[0].mxu0
        %v2829 = vadd.f32 0.0, %v2828
        %v2830 = vpop.f32.mrb[0].mxu0
        %v2831 = vpop.f32.mrb[0].mxu0
        %v2832 = vadd.f32 0.0, %v2831
        %v2833 = vpop.f32.mrb[0].mxu0
        %2834 = vmatprep.mubr.bf16.mxu0 0
        %2835 = vmatmul.mubr.bf16.gmra.mrb[0].mxu0 %v1436
        %v2836 = vpop.f32.mrb[0].mxu0
        %v2837 = vadd.f32 0.0, %v2836
        %v2838 = vpop.f32.mrb[0].mxu0
        %v2839 = vpop.f32.mrb[0].mxu0
        %v2840 = vadd.f32 0.0, %v2839
        %v2841 = vpop.f32.mrb[0].mxu0
        %2842 = vmatprep.mubr.bf16.mxu0 0
        %2843 = vmatmul.mubr.bf16.gmra.mrb[0].mxu0 %v1439
        %v2844 = vpop.f32.mrb[0].mxu0
        %v2845 = vadd.f32 0.0, %v2844
        %v2846 = vpop.f32.mrb[0].mxu0
        %v2847 = vpop.f32.mrb[0].mxu0
        %v2848 = vadd.f32 0.0, %v2847
        %v2849 = vpop.f32.mrb[0].mxu0
        %2850 = vmatprep.mubr.bf16.mxu0 0
        %2851 = vmatmul.mubr.bf16.gmra.mrb[0].mxu0 %v1442
        %v2852 = vpop.f32.mrb[0].mxu0
        %v2853 = vadd.f32 0.0, %v2852
        %v2854 = vpop.f32.mrb[0].mxu0
        %v2855 = vpop.f32.mrb[0].mxu0
        %v2856 = vadd.f32 0.0, %v2855
        %v2857 = vpop.f32.mrb[0].mxu0
        %2858 = vmatprep.mubr.bf16.mxu0 0
        %2859 = vmatmul.mubr.bf16.gmra.mrb[0].mxu0 %v1445
        %v2860 = vpop.f32.mrb[0].mxu0
        %v2861 = vadd.f32 0.0, %v2860
        %v2862 = vpop.f32.mrb[0].mxu0
        %v2863 = vpop.f32.mrb[0].mxu0
        %v2864 = vadd.f32 0.0, %v2863
        %v2865 = vpop.f32.mrb[0].mxu0
        %2866 = vmatprep.mubr.bf16.mxu0 0
        %2867 = vmatmul.mubr.bf16.gmra.mrb[0].mxu0 %v1448
        %v2868 = vpop.f32.mrb[0].mxu0
        %v2869 = vadd.f32 0.0, %v2868
        %v2870 = vpop.f32.mrb[0].mxu0
        %v2871 = vpop.f32.mrb[0].mxu0
        %v2872 = vadd.f32 0.0, %v2871
        %v2873 = vpop.f32.mrb[0].mxu0
        %2874 = vmatprep.mubr.bf16.mxu0 0
        %2875 = vmatmul.mubr.bf16.gmra.mrb[0].mxu0 %v1451
        %v2876 = vpop.f32.mrb[0].mxu0
        %v2877 = vadd.f32 0.0, %v2876
        %v2878 = vpop.f32.mrb[0].mxu0
        %v2879 = vpop.f32.mrb[0].mxu0
        %v2880 = vadd.f32 0.0, %v2879
        %v2881 = vpop.f32.mrb[0].mxu0
        %2882 = vmatprep.mubr.bf16.mxu0 0
        %2883 = vmatmul.mubr.bf16.gmra.mrb[0].mxu0 %v1454
        %v2884 = vpop.f32.mrb[0].mxu0
        %v2885 = vadd.f32 0.0, %v2884
        %v2886 = vpop.f32.mrb[0].mxu0
        %v2887 = vpop.f32.mrb[0].mxu0
        %v2888 = vadd.f32 0.0, %v2887
        %v2889 = vpop.f32.mrb[0].mxu0
        %2890 = vmatprep.mubr.bf16.mxu0 0
        %2891 = vmatmul.mubr.bf16.gmra.mrb[0].mxu0 %v1457
        %v2892 = vpop.f32.mrb[0].mxu0
        %v2893 = vadd.f32 0.0, %v2892
        %v2894 = vpop.f32.mrb[0].mxu0
        %v2895 = vpop.f32.mrb[0].mxu0
        %v2896 = vadd.f32 0.0, %v2895
        %v2897 = vpop.f32.mrb[0].mxu0
        %2898 = vmatprep.mubr.bf16.mxu0 0
        %2899 = vmatmul.mubr.bf16.gmra.mrb[0].mxu0 %v2103
        %v2900 = vpop.f32.mrb[0].mxu0
        %v2901 = vadd.f32 0.0, %v2900
        %v2902 = vpop.f32.mrb[0].mxu0
        %v2903 = vpop.f32.mrb[0].mxu0
        %v2904 = vadd.f32 0.0, %v2903
        %v2905 = vpop.f32.mrb[0].mxu0
        %2906 = vmatprep.mubr.bf16.mxu0 0
        %2907 = vmatmul.mubr.bf16.gmra.mrb[0].mxu0 %v2749
        %v2908 = vpop.f32.mrb[0].mxu0
        %v2909 = vadd.f32 0.0, %v2908
        %v2910 = vpop.f32.mrb[0].mxu0
        %v2911 = vpop.f32.mrb[0].mxu0
        %v2912 = vadd.f32 0.0, %v2911
        %v2913 = vpop.f32.mrb[0].mxu0
        %2914 = vdwg.mxu0
        %v2915 = vadd.f32 %v2703, %v2789
        %v2916 = vadd.f32 %v2704, %v2792
        %v2917 = vadd.f32 %v2705, %v2797
        %v2918 = vadd.f32 %v2706, %v2800
        %v2919 = vadd.f32 %v2707, %v2805
        %v2920 = vadd.f32 %v2708, %v2808
        %v2921 = vadd.f32 %v2709, %v2813
        %v2922 = vadd.f32 %v2710, %v2816
        %v2923 = vadd.f32 %v2711, %v2821
        %v2924 = vadd.f32 %v2712, %v2824
        %v2925 = vadd.f32 %v2713, %v2829
        %v2926 = vadd.f32 %v2714, %v2832
        %v2927 = vadd.f32 %v2715, %v2837
        %v2928 = vadd.f32 %v2716, %v2840
        %v2929 = vadd.f32 %v2717, %v2845
        %v2930 = vadd.f32 %v2718, %v2848
        %v2931 = vadd.f32 %v2719, %v2853
        %v2932 = vadd.f32 %v2720, %v2856
        %v2933 = vadd.f32 %v2721, %v2861
        %v2934 = vadd.f32 %v2722, %v2864
        %v2935 = vadd.f32 %v2723, %v2869
        %v2936 = vadd.f32 %v2724, %v2872
        %v2937 = vadd.f32 %v2725, %v2877
        %v2938 = vadd.f32 %v2726, %v2880
        %v2939 = vadd.f32 %v2727, %v2885
        %v2940 = vadd.f32 %v2728, %v2888
        %v2941 = vadd.f32 %v2729, %v2893
        %v2942 = vadd.f32 %v2730, %v2896
        %v2943 = vadd.f32 %v2731, %v2901
        %v2944 = vadd.f32 %v2732, %v2904
        %v2945 = vadd.f32 %v2733, %v2909
        %v2946 = vadd.f32 %v2734, %v2912
        %v2947 = vld [vmem:[%s230] sm:$0x1]
        %v2949 = vlaneseq
        %v2950 = vshrl.u32 %v2949, 7
        %v2951 = vsub.s32 0, %v2950
        %v2952 = vrot.slane %v2947, %v2951
        %v2954 = vadd.f32 %v2915, %v2952
        %v2955 = vadd.f32 %v2916, %v2952
        %v2956 = vadd.f32 %v2917, %v2952
        %v2957 = vadd.f32 %v2918, %v2952
        %v2958 = vadd.f32 %v2919, %v2952
        %v2959 = vadd.f32 %v2920, %v2952
        %v2960 = vadd.f32 %v2921, %v2952
        %v2961 = vadd.f32 %v2922, %v2952
        %v2962 = vadd.f32 %v2923, %v2952
        %v2963 = vadd.f32 %v2924, %v2952
        %v2964 = vadd.f32 %v2925, %v2952
        %v2965 = vadd.f32 %v2926, %v2952
        %v2966 = vadd.f32 %v2927, %v2952
        %v2967 = vadd.f32 %v2928, %v2952
        %v2968 = vadd.f32 %v2929, %v2952
        %v2969 = vadd.f32 %v2930, %v2952
        %v2970 = vadd.f32 %v2931, %v2952
        %v2971 = vadd.f32 %v2932, %v2952
        %v2972 = vadd.f32 %v2933, %v2952
        %v2973 = vadd.f32 %v2934, %v2952
        %v2974 = vadd.f32 %v2935, %v2952
        %v2975 = vadd.f32 %v2936, %v2952
        %v2976 = vadd.f32 %v2937, %v2952
        %v2977 = vadd.f32 %v2938, %v2952
        %v2978 = vadd.f32 %v2939, %v2952
        %v2979 = vadd.f32 %v2940, %v2952
        %v2980 = vadd.f32 %v2941, %v2952
        %v2981 = vadd.f32 %v2942, %v2952
        %v2982 = vadd.f32 %v2943, %v2952
        %v2983 = vadd.f32 %v2944, %v2952
        %v2984 = vadd.f32 %v2945, %v2952
        %v2985 = vadd.f32 %v2946, %v2952
        %v2986 = vadd.f32 %v2954, 3.0
        %v2987 = vadd.f32 %v2955, 3.0
        %v2988 = vadd.f32 %v2956, 3.0
        %v2989 = vadd.f32 %v2957, 3.0
        %v2990 = vadd.f32 %v2958, 3.0
        %v2991 = vadd.f32 %v2959, 3.0
        %v2992 = vadd.f32 %v2960, 3.0
        %v2993 = vadd.f32 %v2961, 3.0
        %v2994 = vadd.f32 %v2962, 3.0
        %v2995 = vadd.f32 %v2963, 3.0
        %v2996 = vadd.f32 %v2964, 3.0
        %v2997 = vadd.f32 %v2965, 3.0
        %v2998 = vadd.f32 %v2966, 3.0
        %v2999 = vadd.f32 %v2967, 3.0
        %v3000 = vadd.f32 %v2968, 3.0
        %v3001 = vadd.f32 %v2969, 3.0
        %v3002 = vadd.f32 %v2970, 3.0
        %v3003 = vadd.f32 %v2971, 3.0
        %v3004 = vadd.f32 %v2972, 3.0
        %v3005 = vadd.f32 %v2973, 3.0
        %v3006 = vadd.f32 %v2974, 3.0
        %v3007 = vadd.f32 %v2975, 3.0
        %v3008 = vadd.f32 %v2976, 3.0
        %v3009 = vadd.f32 %v2977, 3.0
        %v3010 = vadd.f32 %v2978, 3.0
        %v3011 = vadd.f32 %v2979, 3.0
        %v3012 = vadd.f32 %v2980, 3.0
        %v3013 = vadd.f32 %v2981, 3.0
        %v3014 = vadd.f32 %v2982, 3.0
        %v3015 = vadd.f32 %v2983, 3.0
        %v3016 = vadd.f32 %v2984, 3.0
        %v3017 = vadd.f32 %v2985, 3.0
        %v3018 = vmax.f32 %v2986, 0.0
        %v3019 = vmax.f32 %v2987, 0.0
        %v3020 = vmax.f32 %v2988, 0.0
        %v3021 = vmax.f32 %v2989, 0.0
        %v3022 = vmax.f32 %v2990, 0.0
        %v3023 = vmax.f32 %v2991, 0.0
        %v3024 = vmax.f32 %v2992, 0.0
        %v3025 = vmax.f32 %v2993, 0.0
        %v3026 = vmax.f32 %v2994, 0.0
        %v3027 = vmax.f32 %v2995, 0.0
        %v3028 = vmax.f32 %v2996, 0.0
        %v3029 = vmax.f32 %v2997, 0.0
        %v3030 = vmax.f32 %v2998, 0.0
        %v3031 = vmax.f32 %v2999, 0.0
        %v3032 = vmax.f32 %v3000, 0.0
        %v3033 = vmax.f32 %v3001, 0.0
        %v3034 = vmax.f32 %v3002, 0.0
        %v3035 = vmax.f32 %v3003, 0.0
        %v3036 = vmax.f32 %v3004, 0.0
        %v3037 = vmax.f32 %v3005, 0.0
        %v3038 = vmax.f32 %v3006, 0.0
        %v3039 = vmax.f32 %v3007, 0.0
        %v3040 = vmax.f32 %v3008, 0.0
        %v3041 = vmax.f32 %v3009, 0.0
        %v3042 = vmax.f32 %v3010, 0.0
        %v3043 = vmax.f32 %v3011, 0.0
        %v3044 = vmax.f32 %v3012, 0.0
        %v3045 = vmax.f32 %v3013, 0.0
        %v3046 = vmax.f32 %v3014, 0.0
        %v3047 = vmax.f32 %v3015, 0.0
        %v3048 = vmax.f32 %v3016, 0.0
        %v3049 = vmax.f32 %v3017, 0.0
        %v3050 = vmin.f32 %v3018, 6.0
        %v3051 = vmin.f32 %v3019, 6.0
        %v3052 = vmin.f32 %v3020, 6.0
        %v3053 = vmin.f32 %v3021, 6.0
        %v3054 = vmin.f32 %v3022, 6.0
        %v3055 = vmin.f32 %v3023, 6.0
        %v3056 = vmin.f32 %v3024, 6.0
        %v3057 = vmin.f32 %v3025, 6.0
        %v3058 = vmin.f32 %v3026, 6.0
        %v3059 = vmin.f32 %v3027, 6.0
        %v3060 = vmin.f32 %v3028, 6.0
        %v3061 = vmin.f32 %v3029, 6.0
        %v3062 = vmin.f32 %v3030, 6.0
        %v3063 = vmin.f32 %v3031, 6.0
        %v3064 = vmin.f32 %v3032, 6.0
        %v3065 = vmin.f32 %v3033, 6.0
        %v3066 = vmin.f32 %v3034, 6.0
        %v3067 = vmin.f32 %v3035, 6.0
        %v3068 = vmin.f32 %v3036, 6.0
        %v3069 = vmin.f32 %v3037, 6.0
        %v3070 = vmin.f32 %v3038, 6.0
        %v3071 = vmin.f32 %v3039, 6.0
        %v3072 = vmin.f32 %v3040, 6.0
        %v3073 = vmin.f32 %v3041, 6.0
        %v3074 = vmin.f32 %v3042, 6.0
        %v3075 = vmin.f32 %v3043, 6.0
        %v3076 = vmin.f32 %v3044, 6.0
        %v3077 = vmin.f32 %v3045, 6.0
        %v3078 = vmin.f32 %v3046, 6.0
        %v3079 = vmin.f32 %v3047, 6.0
        %v3080 = vmin.f32 %v3048, 6.0
        %v3081 = vmin.f32 %v3049, 6.0
        %v3082 = vmul.f32 %v2954, %v3050
        %v3083 = vmul.f32 %v2955, %v3051
        %v3084 = vmul.f32 %v2956, %v3052
        %v3085 = vmul.f32 %v2957, %v3053
        %v3086 = vmul.f32 %v2958, %v3054
        %v3087 = vmul.f32 %v2959, %v3055
        %v3088 = vmul.f32 %v2960, %v3056
        %v3089 = vmul.f32 %v2961, %v3057
        %v3090 = vmul.f32 %v2962, %v3058
        %v3091 = vmul.f32 %v2963, %v3059
        %v3092 = vmul.f32 %v2964, %v3060
        %v3093 = vmul.f32 %v2965, %v3061
        %v3094 = vmul.f32 %v2966, %v3062
        %v3095 = vmul.f32 %v2967, %v3063
        %v3096 = vmul.f32 %v2968, %v3064
        %v3097 = vmul.f32 %v2969, %v3065
        %v3098 = vmul.f32 %v2970, %v3066
        %v3099 = vmul.f32 %v2971, %v3067
        %v3100 = vmul.f32 %v2972, %v3068
        %v3101 = vmul.f32 %v2973, %v3069
        %v3102 = vmul.f32 %v2974, %v3070
        %v3103 = vmul.f32 %v2975, %v3071
        %v3104 = vmul.f32 %v2976, %v3072
        %v3105 = vmul.f32 %v2977, %v3073
        %v3106 = vmul.f32 %v2978, %v3074
        %v3107 = vmul.f32 %v2979, %v3075
        %v3108 = vmul.f32 %v2980, %v3076
        %v3109 = vmul.f32 %v2981, %v3077
        %v3110 = vmul.f32 %v2982, %v3078
        %v3111 = vmul.f32 %v2983, %v3079
        %v3112 = vmul.f32 %v2984, %v3080
        %v3113 = vmul.f32 %v2985, %v3081
        %v3114 = vmul.f32 %v3082, 0.16666667
        %v3115 = vmul.f32 %v3083, 0.16666667
        %v3116 = vmul.f32 %v3084, 0.16666667
        %v3117 = vmul.f32 %v3085, 0.16666667
        %v3118 = vmul.f32 %v3086, 0.16666667
        %v3119 = vmul.f32 %v3087, 0.16666667
        %v3120 = vmul.f32 %v3088, 0.16666667
        %v3121 = vmul.f32 %v3089, 0.16666667
        %v3122 = vmul.f32 %v3090, 0.16666667
        %v3123 = vmul.f32 %v3091, 0.16666667
        %v3124 = vmul.f32 %v3092, 0.16666667
        %v3125 = vmul.f32 %v3093, 0.16666667
        %v3126 = vmul.f32 %v3094, 0.16666667
        %v3127 = vmul.f32 %v3095, 0.16666667
        %v3128 = vmul.f32 %v3096, 0.16666667
        %v3129 = vmul.f32 %v3097, 0.16666667
        %v3130 = vmul.f32 %v3098, 0.16666667
        %v3131 = vmul.f32 %v3099, 0.16666667
        %v3132 = vmul.f32 %v3100, 0.16666667
        %v3133 = vmul.f32 %v3101, 0.16666667
        %v3134 = vmul.f32 %v3102, 0.16666667
        %v3135 = vmul.f32 %v3103, 0.16666667
        %v3136 = vmul.f32 %v3104, 0.16666667
        %v3137 = vmul.f32 %v3105, 0.16666667
        %v3138 = vmul.f32 %v3106, 0.16666667
        %v3139 = vmul.f32 %v3107, 0.16666667
        %v3140 = vmul.f32 %v3108, 0.16666667
        %v3141 = vmul.f32 %v3109, 0.16666667
        %v3142 = vmul.f32 %v3110, 0.16666667
        %v3143 = vmul.f32 %v3111, 0.16666667
        %v3144 = vmul.f32 %v3112, 0.16666667
        %v3145 = vmul.f32 %v3113, 0.16666667
        %3146 = vst [vmem:[%s213] sm:$0xff] %v3114
        %3147 = vst [vmem:[%s213 + $0x8] sm:$0xff] %v3115
        %3148 = vst [vmem:[%s213 + $0x10] sm:$0xff] %v3116
        %3149 = vst [vmem:[%s213 + $0x18] sm:$0xff] %v3117
        %3150 = vst [vmem:[%s213 + $0x20] sm:$0xff] %v3118
        %3151 = vst [vmem:[%s213 + $0x28] sm:$0xff] %v3119
        %3152 = vst [vmem:[%s213 + $0x30] sm:$0xff] %v3120
        %3153 = vst [vmem:[%s213 + $0x38] sm:$0xff] %v3121
        %3154 = vst [vmem:[%s213 + $0x40] sm:$0xff] %v3122
        %3155 = vst [vmem:[%s213 + $0x48] sm:$0xff] %v3123
        %3156 = vst [vmem:[%s213 + $0x50] sm:$0xff] %v3124
        %3157 = vst [vmem:[%s213 + $0x58] sm:$0xff] %v3125
        %3158 = vst [vmem:[%s213 + $0x60] sm:$0xff] %v3126
        %3159 = vst [vmem:[%s213 + $0x68] sm:$0xff] %v3127
        %3160 = vst [vmem:[%s213 + $0x70] sm:$0xff] %v3128
        %3161 = vst [vmem:[%s213 + $0x78] sm:$0xff] %v3129
        %3162 = vst [vmem:[%s213 + $0x80] sm:$0xff] %v3130
        %3163 = vst [vmem:[%s213 + $0x88] sm:$0xff] %v3131
        %3164 = vst [vmem:[%s213 + $0x90] sm:$0xff] %v3132
        %3165 = vst [vmem:[%s213 + $0x98] sm:$0xff] %v3133
        %3166 = vst [vmem:[%s213 + $0xa0] sm:$0xff] %v3134
        %3167 = vst [vmem:[%s213 + $0xa8] sm:$0xff] %v3135
        %3168 = vst [vmem:[%s213 + $0xb0] sm:$0xff] %v3136
        %3169 = vst [vmem:[%s213 + $0xb8] sm:$0xff] %v3137
        %3170 = vst [vmem:[%s213 + $0xc0] sm:$0xff] %v3138
        %3171 = vst [vmem:[%s213 + $0xc8] sm:$0xff] %v3139
        %3172 = vst [vmem:[%s213 + $0xd0] sm:$0xff] %v3140
        %3173 = vst [vmem:[%s213 + $0xd8] sm:$0xff] %v3141
        %3174 = vst [vmem:[%s213 + $0xe0] sm:$0xff] %v3142
        %3175 = vst [vmem:[%s213 + $0xe8] sm:$0xff] %v3143
        %3176 = vst [vmem:[%s213 + $0xf0] sm:$0xff] %v3144
        %3177 = vst [vmem:[%s213 + $0xf8] sm:$0xff] %v3145
        %s3178 = sand.u32 %s119, 1
        %s3179 = scalar_lea.sflag [#allocation3], %s3178
        %s3180 = sand.u32 %s119, 1
        %s3181 = smul.addr %s3180, 256
        %s3182 = scalar_lea.vmem [#allocation2], %s3181
        // Predicated region
        $region33: #{tpu_custom_call.1} parent=31 // pred_check
          %p3183 = pneg %p129
        $region34: #{tpu_custom_call.1} parent=31 // pred_check_branch
          %3185 = sbr.rel (%p3183) target = $region36
        $region35: #{tpu_custom_call.1} parent=31 // pred_region
          %s3187 = ssub.s32 4096, 4096
          %3188 = vsyncadd %s3179, %s3187
          %s3189 = smul.addr %s22, 32
          %s3190 = sadd.s32 %s21, %s3189
          %s3191 = smul.addr %s3190, 128
          %s3192 = scalar_lea.hbm %s3, %s3191
          %s3193 = sshll.u32 %s3182, 4
          %s3194 = int_to_ptr.vmem [resolvable:$true] %s3193
          %3199 = dma.vmem_to_hbm [thread:$0]  %s3194, 4096, %s3192, %s3179, 128, 128, 8
        $region36: #{tpu_custom_call.1} parent=31 // pred_fallthru
          _
      $region32: #{tpu_custom_call.1} parent=5 // pred_fallthru
        _
      %p3200 = scmp.le.s32.totalorder 2, %s12
      // Predicated region
      $region37: #{tpu_custom_call.1} parent=5 // pred_check
        %p3201 = pneg %p3200
      $region38: #{tpu_custom_call.1} parent=5 // pred_check_branch
        %3203 = sbr.rel (%p3201) target = $region40
      $region39: #{tpu_custom_call.1} parent=5 // pred_region
        %s3204 = ssub.s32 %s12, 2
        // Predicated region
        $region41: #{tpu_custom_call.1} parent=39 // pred_check
          %p3205 = pneg %p135
        $region42: #{tpu_custom_call.1} parent=39 // pred_check_branch
          %3207 = sbr.rel (%p3205) target = $region44
        $region43: #{tpu_custom_call.1} parent=39 // pred_region
          %s3208 = sand.u32 %s120, 1
          %s3209 = scalar_lea.sflag [#allocation3], %s3208
          %s3210 = sand.u32 %s120, 1
          %s3211 = smul.addr %s3210, 256
          %s3212 = scalar_lea.vmem [#allocation2], %s3211
          %3213 = dma.done %s3209, 4096
        $region44: #{tpu_custom_call.1} parent=39 // pred_fallthru
          _
      $region40: #{tpu_custom_call.1} parent=5 // pred_fallthru
        _
    $region6: #{tpu_custom_call.1} parent=1 // loop_footer
      %s16 = sadd.s32 1, %s12
    $region7: #{tpu_custom_call.1} parent=1 // loop_footer_branch
      %11 = sbr.rel target = $region3
    $region8: #{tpu_custom_call.1} parent=1 // loop_exit
      _
    %3214 = vsyncpa [#allocation3], 1
    %s3215 = scalar_lea.sflag [#allocation3], 1
    %3216 = vsyncpa %s3215, 1

</llo_original>
